<compile_context>
chip_gen: v7x
topology: tpu7x:2x2x1
jax: 0.10.0
libtpu: 0.0.40
codegen_flags: <defaults>
</compile_context>

<pallas_src>
import jax
import jax.numpy as jnp
from jax import lax
from jax.experimental import pallas as pl
from jax.experimental.pallas import tpu as pltpu

# -----------------------------------------------------------------------------
# sizes
# -----------------------------------------------------------------------------
B = 2            # batch
N = 128          # points per cloud
NB = B * N       # batch folded into the lane axis -> 256 lanes
D_DESC = 8       # args.ntex_channels (neural descriptor channels)
H = 32           # hidden width of stand-in MLPs
C_OUT = 16       # generator output channels

# weight-slab row layout (one (SLAB_ROWS, 128) f32 slab, lanes are the wide axis)
_R_GLO = 0                    # rows [0, H):            lane0=w1[:,0] lane1=w1[:,1] lane2=b1
_R_GEN = H                    # rows [H, H+C_OUT):      lanes[0:H+D)=w2.T, lane H+D = b2
_R_DIS = H + C_OUT            # rows [.., ..+H):        lanes[0:C_OUT+D)=wd.T, lane C_OUT+D = bd
_R_HEAD = _R_DIS + H          # row _R_HEAD:            lanes[0:H) = wd2 (head row vector)
SLAB_ROWS = _R_HEAD + 8       # 88 (padded to an 8-sublane multiple)


# -----------------------------------------------------------------------------
# Fused kernel: augment_coords -> glo_model -> generator -> discriminator
#               -> criteria (L1 + LSGAN), channels-first, batch folded in lanes
# -----------------------------------------------------------------------------
def _fused_kernel(tf_ref, coords_ref, ndesc_ref, target_ref, w_ref,
                  fake_ref, aux_ref):
    lane = lax.broadcasted_iota(jnp.int32, (1, NB), 1)   # folded batch*point lane index
    in_b1 = lane >= N                                    # lanes of batch 1

    # ---- augment_coords (fused): per-batch affine (rows 0-1 of the 3x3) + neg-coord mask
    def tcoef(k):                                        # per-lane transform coefficient
        return jnp.where(in_b1, tf_ref[9 + k], tf_ref[k])
    x = coords_ref[0:1, :]                               # (1, NB)
    y = coords_ref[1:2, :]
    xa = jnp.where(x < 0.0, jnp.float32(-1.0), tcoef(0) * x + tcoef(1) * y + tcoef(2))
    ya = jnp.where(y < 0.0, jnp.float32(-1.0), tcoef(3) * x + tcoef(4) * y + tcoef(5))

    nd = ndesc_ref[...]                                  # (D_DESC, NB)
    tgt = target_ref[...]                                # (C_OUT, NB)

    # ---- single packed weight slab: zero-cost static sub-views
    w1c0 = w_ref[0:H, 0:1]                               # (H, 1)
    w1c1 = w_ref[0:H, 1:2]
    b1 = w_ref[0:H, 2:3]
    w2 = w_ref[_R_GEN:_R_GEN + C_OUT, 0:H + D_DESC]      # (C_OUT, H+D)
    b2 = w_ref[_R_GEN:_R_GEN + C_OUT, H + D_DESC:H + D_DESC + 1]
    wd = w_ref[_R_DIS:_R_DIS + H, 0:C_OUT + D_DESC]      # (H, C_OUT+D)
    bd = w_ref[_R_DIS:_R_DIS + H, C_OUT + D_DESC:C_OUT + D_DESC + 1]
    wd2 = w_ref[_R_HEAD:_R_HEAD + 1, 0:H]                # (1, H)

    # ---- glo_model stand-in: per-point MLP on augmented coords (K=2 -> VPU)
    h = jnp.maximum(w1c0 * xa + w1c1 * ya + b1, 0.0)     # (H, NB)

    # ---- generator stand-in: ONE merged matmul over the sublane-stacked [h; nd]
    gen_in = jnp.concatenate([h, nd], axis=0)            # (H+D, NB), 8-row aligned stack
    g = jnp.tanh(jnp.dot(w2, gen_in, preferred_element_type=jnp.float32) + b2)  # (C_OUT, NB)
    fake_ref[...] = g

    # ---- discriminator stand-in: fake/real stacked along lanes, merged weight
    din_f = jnp.concatenate([g, nd], axis=0)             # (C_OUT+D, NB)
    din_r = jnp.concatenate([tgt, nd], axis=0)           # (C_OUT+D, NB)
    din = jnp.concatenate([din_f, din_r], axis=-1)       # (C_OUT+D, 2*NB)
    hd = jnp.maximum(jnp.dot(wd, din, preferred_element_type=jnp.float32) + bd, 0.0)  # (H, 2*NB)
    scores = jnp.dot(wd2, hd, preferred_element_type=jnp.float32)  # (1, 2*NB) per-point scores

    # per-batch / per-branch means over points: 4 segments of N lanes
    lane4 = lax.broadcasted_iota(jnp.int32, (1, 2 * NB), 1)
    inv_n = jnp.float32(1.0 / N)

    def seg_mean(k):
        m = (lane4 >= k * N) & (lane4 < (k + 1) * N)
        return jnp.sum(jnp.where(m, scores, 0.0)) * inv_n

    sf0 = seg_mean(0)   # score_fake, batch 0
    sf1 = seg_mean(1)   # score_fake, batch 1
    sr0 = seg_mean(2)   # score_real, batch 0
    sr1 = seg_mean(3)   # score_real, batch 1

    # ---- criterion stand-ins: per-batch L1 reconstruction + LSGAN losses
    diff = jnp.abs(g - tgt)                              # (C_OUT, NB)
    lane_c = lax.broadcasted_iota(jnp.int32, (C_OUT, NB), 1)
    inv_cn = jnp.float32(1.0 / (C_OUT * N))
    l10 = jnp.sum(jnp.where(lane_c < N, diff, 0.0)) * inv_cn
    l11 = jnp.sum(jnp.where(lane_c >= N, diff, 0.0)) * inv_cn
    ga0 = (sf0 - 1.0) ** 2
    ga1 = (sf1 - 1.0) ** 2
    da0 = 0.5 * (sf0 * sf0 + (sr0 - 1.0) ** 2)
    da1 = 0.5 * (sf1 * sf1 + (sr1 - 1.0) ** 2)

    # ---- pack coords_aug (rows 0-1) + the 10 per-batch scalars (row 2) into one
    #      8-sublane slab -> single unmasked full-tile store
    stats_row = jnp.zeros((1, NB), jnp.float32)
    for i, v in enumerate((sf0, sf1, sr0, sr1, l10, l11, ga0, ga1, da0, da1)):
        stats_row = jnp.where(lane == i, v, stats_row)
    row = lax.broadcasted_iota(jnp.int32, (8, NB), 0)
    aux = jnp.where(row == 0, xa,
          jnp.where(row == 1, ya,
          jnp.where(row == 2, stats_row, jnp.float32(0.0))))
    aux_ref[...] = aux


def run_fused(transform_flat, coords_k, ndesc_k, target_k, weight_slab):
    full = lambda shp: pl.BlockSpec(shp, lambda i, _s=shp: (0,) * len(_s))
    fake, aux = pl.pallas_call(
        _fused_kernel,
        out_shape=(
            jax.ShapeDtypeStruct((C_OUT, NB), jnp.float32),   # fake, channels-first, batch in lanes
            jax.ShapeDtypeStruct((8, NB), jnp.float32),       # rows 0-1 coords_aug, row 2 stats
        ),
        grid=(1,),
        in_specs=[
            pl.BlockSpec(memory_space=pltpu.MemorySpace.SMEM),  # transform, flat (B*9,)
            full((2, NB)),                                      # coords     (2, 256)
            full((D_DESC, NB)),                                 # ndesc      (8, 256)
            full((C_OUT, NB)),                                  # target     (16, 256)
            full((SLAB_ROWS, 128)),                             # packed weights (88, 128) - 1 DMA
        ],
        out_specs=(
            full((C_OUT, NB)),
            full((8, NB)),
        ),
        compiler_params=pltpu.CompilerParams(
            dimension_semantics=("arbitrary",)),
    )(transform_flat, coords_k, ndesc_k, target_k, weight_slab)
    return fake, aux


# -----------------------------------------------------------------------------
# host-side weight prep: pack all stand-in parameters into ONE lane-dense slab
# -----------------------------------------------------------------------------
def prepare_params(params):
    slab = jnp.zeros((SLAB_ROWS, 128), jnp.float32)
    slab = slab.at[_R_GLO:_R_GLO + H, 0:2].set(params["w1"].T)              # (H, 2)
    slab = slab.at[_R_GLO:_R_GLO + H, 2].set(params["b1"][0])               # (H,)
    slab = slab.at[_R_GEN:_R_GEN + C_OUT, 0:H + D_DESC].set(params["w2"].T)  # (C_OUT, H+D)
    slab = slab.at[_R_GEN:_R_GEN + C_OUT, H + D_DESC].set(params["b2"][0])   # (C_OUT,)
    slab = slab.at[_R_DIS:_R_DIS + H, 0:C_OUT + D_DESC].set(params["wd"].T)  # (H, C_OUT+D)
    slab = slab.at[_R_DIS:_R_DIS + H, C_OUT + D_DESC].set(params["bd"][0])   # (H,)
    slab = slab.at[_R_HEAD, 0:H].set(params["wd2"][0])                       # (H,) head row
    return slab


# -----------------------------------------------------------------------------
# TrainingModule.forward equivalent
# -----------------------------------------------------------------------------
def training_module_forward(data_dict, target_dict, ndesc_stack, weight_slab, phase="train"):
    # TODO(synk): PCDConverter.source_to_c3d_dict / result_to_azure_dict are
    # dataset-specific dict re-keyings with no tensor math; treated as identity.
    data_dict = dict(data_dict)

    pids = data_dict["seq"]
    ndesc_bnd = ndesc_stack["desc"][pids]                               # (B, N, D)
    # module layout (permute(0,2,1)) kept for downstream consumers
    data_dict["ndesc"] = jnp.transpose(ndesc_bnd, (0, 2, 1))            # (B, D, N)

    # kernel layout: channels-first with the batch folded into the lane axis
    coords_k = jnp.transpose(data_dict["coords"], (2, 0, 1)).reshape(2, NB)
    ndesc_k = jnp.transpose(ndesc_bnd, (2, 0, 1)).reshape(D_DESC, NB)
    target_k = jnp.transpose(target_dict["target"], (1, 0, 2)).reshape(C_OUT, NB)

    # TODO(synk): kornia RandomAffine augmenter is stochastic & external; a fixed
    # affine transform is supplied instead, applied inside the fused kernel.
    transform_flat = data_dict["transform"].reshape(B * 9)

    # TODO(synk): Renderer.render_dict (point rasterization onto an image grid)
    # has no clean Pallas equivalent here; point descriptors are fed directly.
    # glo_model / generator / discriminator / criterion stand-ins all run fused.
    fake2, aux2 = run_fused(transform_flat, coords_k, ndesc_k, target_k, weight_slab)

    fake = jnp.transpose(fake2.reshape(C_OUT, B, N), (1, 0, 2))         # (B, C_OUT, N)
    coords_aug = jnp.transpose(aux2[0:2].reshape(2, B, N), (1, 0, 2))   # (B, 2, N)
    stats = aux2[2]                                                     # (NB,): per-batch scalars in lanes 0..9

    disc_in = dict(data_dict)
    disc_in.update(target_dict)
    disc_in["fake"] = fake
    disc_in["coords_aug"] = coords_aug

    if phase == "test":
        return disc_in, {}, {}

    disc_out = {"score_fake": stats[0:2], "score_real": stats[2:4]}
    criterion_in = dict(disc_in)
    criterion_in.update(disc_out)

    losses_G = {
        "loss_l1": jnp.mean(stats[4:6]),
        "loss_G_adv": jnp.mean(stats[6:8]),
    }
    losses_D = {
        "loss_D_adv": jnp.mean(stats[8:10]),
    }
    return criterion_in, losses_G, losses_D


# -----------------------------------------------------------------------------
# main
# -----------------------------------------------------------------------------
if __name__ == "__main__":
    key = jax.random.PRNGKey(0)
    ks = jax.random.split(key, 12)

    # inputs (coords kept in the module's torch layout (B, N, 2))
    coords = jax.random.uniform(ks[0], (B, N, 2), jnp.float32, minval=-0.2, maxval=1.0)
    theta = 0.1
    base_tf = jnp.array(
        [[jnp.cos(theta), -jnp.sin(theta), 0.05],
         [jnp.sin(theta), jnp.cos(theta), -0.03],
         [0.0, 0.0, 1.0]], jnp.float32)
    transform = (jnp.broadcast_to(base_tf, (B, 3, 3))
                 + 0.01 * jax.random.normal(ks[1], (B, 3, 3), jnp.float32))
    pids = jnp.array([0, 2], jnp.int32)

    data_dict = {"coords": coords, "transform": transform, "seq": pids}
    # target in channels-first layout, matching the generator's "fake" output
    target_dict = {"target": jax.random.normal(ks[2], (B, C_OUT, N), jnp.float32)}
    ndesc_stack = {"desc": 0.1 * jax.random.normal(ks[3], (4, N, D_DESC), jnp.float32)}

    # deterministic stand-in parameters (natural layout), packed once into the slab
    params = {
        "w1": 0.5 * jax.random.normal(ks[4], (2, H), jnp.float32),
        "b1": 0.1 * jax.random.normal(ks[5], (1, H), jnp.float32),
        "w2": 0.2 * jax.random.normal(ks[6], (H + D_DESC, C_OUT), jnp.float32),
        "b2": 0.1 * jax.random.normal(ks[7], (1, C_OUT), jnp.float32),
        "wd": 0.2 * jax.random.normal(ks[8], (C_OUT + D_DESC, H), jnp.float32),
        "bd": 0.1 * jax.random.normal(ks[9], (1, H), jnp.float32),
        "wd2": 0.2 * jax.random.normal(ks[10], (1, H), jnp.float32),
    }
    weight_slab = prepare_params(params)

    criterion_in, losses_G, losses_D = training_module_forward(
        data_dict, target_dict, ndesc_stack, weight_slab, phase="train")

    jax.block_until_ready(criterion_in["fake"])
    jax.block_until_ready(criterion_in["coords_aug"])
    jax.block_until_ready(criterion_in["score_fake"])
    jax.block_until_ready(losses_G["loss_l1"])
    jax.block_until_ready(losses_G["loss_G_adv"])
    jax.block_until_ready(losses_D["loss_D_adv"])

    # also exercise the test-phase early-return branch
    disc_in, _, _ = training_module_forward(
        data_dict, target_dict, ndesc_stack, weight_slab, phase="test")
    jax.block_until_ready(disc_in["fake"])

    print("KERNEL_OK")
</pallas_src>

<mosaic_0001>
module attributes {stable_mosaic.version = 11 : i64} {
  func.func @_fused_kernel(%arg0: i32, %arg1: memref<18xf32, #tpu.memory_space<smem>>, %arg2: memref<2x256xf32, #tpu.memory_space<vmem>>, %arg3: memref<8x256xf32, #tpu.memory_space<vmem>>, %arg4: memref<16x256xf32, #tpu.memory_space<vmem>>, %arg5: memref<88x128xf32, #tpu.memory_space<vmem>>, %arg6: memref<16x256xf32, #tpu.memory_space<vmem>>, %arg7: memref<8x256xf32, #tpu.memory_space<vmem>>) attributes {dimension_semantics = [#tpu.dimension_semantics<arbitrary>], iteration_bounds = array<i64: 1>, scalar_prefetch = 0 : i64, scratch_operands = 0 : i64, tpu.core_type = #tpu.core_type<tc>, window_params = [{transform_indices = @transform_0, window_bounds = array<i64: 18>}, {pipeline_mode = #tpu.pipeline_mode<synchronous>, transform_indices = @transform_1, window_bounds = array<i64: 2, 256>}, {pipeline_mode = #tpu.pipeline_mode<synchronous>, transform_indices = @transform_2, window_bounds = array<i64: 8, 256>}, {pipeline_mode = #tpu.pipeline_mode<synchronous>, transform_indices = @transform_3, window_bounds = array<i64: 16, 256>}, {pipeline_mode = #tpu.pipeline_mode<synchronous>, transform_indices = @transform_4, window_bounds = array<i64: 88, 128>}, {pipeline_mode = #tpu.pipeline_mode<synchronous>, transform_indices = @transform_5, window_bounds = array<i64: 16, 256>}, {pipeline_mode = #tpu.pipeline_mode<synchronous>, transform_indices = @transform_6, window_bounds = array<i64: 8, 256>}]} {
    %0 = tpu.iota {dimensions = array<i32: 1>} : vector<1x256xi32>
    %c128_i32 = arith.constant 128 : i32
    %1 = vector.broadcast %c128_i32 : i32 to vector<1x256xi32>
    %2 = arith.cmpi sge, %0, %1 : vector<1x256xi32>
    %c0 = arith.constant 0 : index
    %c0_0 = arith.constant 0 : index
    %3 = vector.load %arg2[%c0, %c0_0] : memref<2x256xf32, #tpu.memory_space<vmem>>, vector<1x256xf32>
    %c1 = arith.constant 1 : index
    %c0_1 = arith.constant 0 : index
    %4 = vector.load %arg2[%c1, %c0_1] : memref<2x256xf32, #tpu.memory_space<vmem>>, vector<1x256xf32>
    %cst = arith.constant 0.000000e+00 : f32
    %5 = vector.broadcast %cst : f32 to vector<1x256xf32>
    %6 = arith.cmpf olt, %3, %5 : vector<1x256xf32>
    %c9 = arith.constant 9 : index
    %7 = memref.load %arg1[%c9] : memref<18xf32, #tpu.memory_space<smem>>
    %c0_2 = arith.constant 0 : index
    %8 = memref.load %arg1[%c0_2] : memref<18xf32, #tpu.memory_space<smem>>
    %9 = vector.broadcast %7 : f32 to vector<1x256xf32>
    %10 = vector.broadcast %8 : f32 to vector<1x256xf32>
    %11 = arith.select %2, %9, %10 : vector<1x256xi1>, vector<1x256xf32>
    %12 = arith.mulf %11, %3 : vector<1x256xf32>
    %c10 = arith.constant 10 : index
    %13 = memref.load %arg1[%c10] : memref<18xf32, #tpu.memory_space<smem>>
    %c1_3 = arith.constant 1 : index
    %14 = memref.load %arg1[%c1_3] : memref<18xf32, #tpu.memory_space<smem>>
    %15 = vector.broadcast %13 : f32 to vector<1x256xf32>
    %16 = vector.broadcast %14 : f32 to vector<1x256xf32>
    %17 = arith.select %2, %15, %16 : vector<1x256xi1>, vector<1x256xf32>
    %18 = arith.mulf %17, %4 : vector<1x256xf32>
    %19 = arith.addf %12, %18 : vector<1x256xf32>
    %c11 = arith.constant 11 : index
    %20 = memref.load %arg1[%c11] : memref<18xf32, #tpu.memory_space<smem>>
    %c2 = arith.constant 2 : index
    %21 = memref.load %arg1[%c2] : memref<18xf32, #tpu.memory_space<smem>>
    %22 = vector.broadcast %20 : f32 to vector<1x256xf32>
    %23 = vector.broadcast %21 : f32 to vector<1x256xf32>
    %24 = arith.select %2, %22, %23 : vector<1x256xi1>, vector<1x256xf32>
    %25 = arith.addf %19, %24 : vector<1x256xf32>
    %cst_4 = arith.constant -1.000000e+00 : f32
    %26 = vector.broadcast %cst_4 : f32 to vector<1x256xf32>
    %27 = arith.select %6, %26, %25 : vector<1x256xi1>, vector<1x256xf32>
    %cst_5 = arith.constant 0.000000e+00 : f32
    %28 = vector.broadcast %cst_5 : f32 to vector<1x256xf32>
    %29 = arith.cmpf olt, %4, %28 : vector<1x256xf32>
    %c12 = arith.constant 12 : index
    %30 = memref.load %arg1[%c12] : memref<18xf32, #tpu.memory_space<smem>>
    %c3 = arith.constant 3 : index
    %31 = memref.load %arg1[%c3] : memref<18xf32, #tpu.memory_space<smem>>
    %32 = vector.broadcast %30 : f32 to vector<1x256xf32>
    %33 = vector.broadcast %31 : f32 to vector<1x256xf32>
    %34 = arith.select %2, %32, %33 : vector<1x256xi1>, vector<1x256xf32>
    %35 = arith.mulf %34, %3 : vector<1x256xf32>
    %c13 = arith.constant 13 : index
    %36 = memref.load %arg1[%c13] : memref<18xf32, #tpu.memory_space<smem>>
    %c4 = arith.constant 4 : index
    %37 = memref.load %arg1[%c4] : memref<18xf32, #tpu.memory_space<smem>>
    %38 = vector.broadcast %36 : f32 to vector<1x256xf32>
    %39 = vector.broadcast %37 : f32 to vector<1x256xf32>
    %40 = arith.select %2, %38, %39 : vector<1x256xi1>, vector<1x256xf32>
    %41 = arith.mulf %40, %4 : vector<1x256xf32>
    %42 = arith.addf %35, %41 : vector<1x256xf32>
    %c14 = arith.constant 14 : index
    %43 = memref.load %arg1[%c14] : memref<18xf32, #tpu.memory_space<smem>>
    %c5 = arith.constant 5 : index
    %44 = memref.load %arg1[%c5] : memref<18xf32, #tpu.memory_space<smem>>
    %45 = vector.broadcast %43 : f32 to vector<1x256xf32>
    %46 = vector.broadcast %44 : f32 to vector<1x256xf32>
    %47 = arith.select %2, %45, %46 : vector<1x256xi1>, vector<1x256xf32>
    %48 = arith.addf %42, %47 : vector<1x256xf32>
    %cst_6 = arith.constant -1.000000e+00 : f32
    %49 = vector.broadcast %cst_6 : f32 to vector<1x256xf32>
    %50 = arith.select %29, %49, %48 : vector<1x256xi1>, vector<1x256xf32>
    %c0_7 = arith.constant 0 : index
    %c0_8 = arith.constant 0 : index
    %51 = vector.load %arg3[%c0_7, %c0_8] : memref<8x256xf32, #tpu.memory_space<vmem>>, vector<8x256xf32>
    %c0_9 = arith.constant 0 : index
    %c0_10 = arith.constant 0 : index
    %52 = vector.load %arg4[%c0_9, %c0_10] : memref<16x256xf32, #tpu.memory_space<vmem>>, vector<16x256xf32>
    %c0_11 = arith.constant 0 : index
    %c0_12 = arith.constant 0 : index
    %53 = vector.load %arg5[%c0_11, %c0_12] : memref<88x128xf32, #tpu.memory_space<vmem>>, vector<32x1xf32>
    %c0_13 = arith.constant 0 : index
    %c1_14 = arith.constant 1 : index
    %54 = vector.load %arg5[%c0_13, %c1_14] : memref<88x128xf32, #tpu.memory_space<vmem>>, vector<32x1xf32>
    %c0_15 = arith.constant 0 : index
    %c2_16 = arith.constant 2 : index
    %55 = vector.load %arg5[%c0_15, %c2_16] : memref<88x128xf32, #tpu.memory_space<vmem>>, vector<32x1xf32>
    %c32 = arith.constant 32 : index
    %c0_17 = arith.constant 0 : index
    %56 = vector.load %arg5[%c32, %c0_17] : memref<88x128xf32, #tpu.memory_space<vmem>>, vector<16x40xf32>
    %c32_18 = arith.constant 32 : index
    %c40 = arith.constant 40 : index
    %57 = vector.load %arg5[%c32_18, %c40] : memref<88x128xf32, #tpu.memory_space<vmem>>, vector<16x1xf32>
    %c48 = arith.constant 48 : index
    %c0_19 = arith.constant 0 : index
    %58 = vector.load %arg5[%c48, %c0_19] : memref<88x128xf32, #tpu.memory_space<vmem>>, vector<32x24xf32>
    %c48_20 = arith.constant 48 : index
    %c24 = arith.constant 24 : index
    %59 = vector.load %arg5[%c48_20, %c24] : memref<88x128xf32, #tpu.memory_space<vmem>>, vector<32x1xf32>
    %c80 = arith.constant 80 : index
    %c0_21 = arith.constant 0 : index
    %60 = vector.load %arg5[%c80, %c0_21] : memref<88x128xf32, #tpu.memory_space<vmem>>, vector<1x32xf32>
    %61 = vector.broadcast %53 : vector<32x1xf32> to vector<32x256xf32>
    %62 = vector.broadcast %27 : vector<1x256xf32> to vector<32x256xf32>
    %63 = arith.mulf %61, %62 : vector<32x256xf32>
    %64 = vector.broadcast %54 : vector<32x1xf32> to vector<32x256xf32>
    %65 = vector.broadcast %50 : vector<1x256xf32> to vector<32x256xf32>
    %66 = arith.mulf %64, %65 : vector<32x256xf32>
    %67 = arith.addf %63, %66 : vector<32x256xf32>
    %68 = vector.broadcast %55 : vector<32x1xf32> to vector<32x256xf32>
    %69 = arith.addf %67, %68 : vector<32x256xf32>
    %cst_22 = arith.constant 0.000000e+00 : f32
    %70 = vector.broadcast %cst_22 : f32 to vector<32x256xf32>
    %71 = arith.maximumf %69, %70 : vector<32x256xf32>
    %72 = tpu.concatenate %71, %51 in 0 : vector<32x256xf32>, vector<8x256xf32> -> vector<40x256xf32>
    %cst_23 = arith.constant dense<0.000000e+00> : vector<16x256xf32>
    %73 = tpu.matmul %56, %72, %cst_23 {dimension_numbers = #tpu.dot_dimension_numbers<[1], [0], [0], [1], [0, 0, 1, 1], [], []>} : vector<16x40xf32>, vector<40x256xf32>, vector<16x256xf32> -> vector<16x256xf32>
    %74 = vector.broadcast %57 : vector<16x1xf32> to vector<16x256xf32>
    %75 = arith.addf %73, %74 : vector<16x256xf32>
    %76 = math.tanh %75 : vector<16x256xf32>
    %c0_24 = arith.constant 0 : index
    %c0_25 = arith.constant 0 : index
    %77 = vector.load %arg6[%c0_24, %c0_25] : memref<16x256xf32, #tpu.memory_space<vmem>>, vector<16x256xf32>
    tpu.vector_store %arg6[%c0_24, %c0_25], %76 {strides = array<i32>} : memref<16x256xf32, #tpu.memory_space<vmem>>, vector<16x256xf32>,
    %78 = tpu.concatenate %76, %51 in 0 : vector<16x256xf32>, vector<8x256xf32> -> vector<24x256xf32>
    %79 = tpu.concatenate %52, %51 in 0 : vector<16x256xf32>, vector<8x256xf32> -> vector<24x256xf32>
    %80 = tpu.concatenate %78, %79 in 1 : vector<24x256xf32>, vector<24x256xf32> -> vector<24x512xf32>
    %cst_26 = arith.constant dense<0.000000e+00> : vector<32x512xf32>
    %81 = tpu.matmul %58, %80, %cst_26 {dimension_numbers = #tpu.dot_dimension_numbers<[1], [0], [0], [1], [0, 0, 1, 1], [], []>} : vector<32x24xf32>, vector<24x512xf32>, vector<32x512xf32> -> vector<32x512xf32>
    %82 = vector.broadcast %59 : vector<32x1xf32> to vector<32x512xf32>
    %83 = arith.addf %81, %82 : vector<32x512xf32>
    %cst_27 = arith.constant 0.000000e+00 : f32
    %84 = vector.broadcast %cst_27 : f32 to vector<32x512xf32>
    %85 = arith.maximumf %83, %84 : vector<32x512xf32>
    %cst_28 = arith.constant dense<0.000000e+00> : vector<1x512xf32>
    %86 = tpu.matmul %60, %85, %cst_28 {dimension_numbers = #tpu.dot_dimension_numbers<[1], [0], [0], [1], [0, 0, 1, 1], [], []>} : vector<1x32xf32>, vector<32x512xf32>, vector<1x512xf32> -> vector<1x512xf32>
    %87 = tpu.iota {dimensions = array<i32: 1>} : vector<1x512xi32>
    %c0_i32 = arith.constant 0 : i32
    %88 = vector.broadcast %c0_i32 : i32 to vector<1x512xi32>
    %89 = arith.cmpi sge, %87, %88 : vector<1x512xi32>
    %c128_i32_29 = arith.constant 128 : i32
    %90 = vector.broadcast %c128_i32_29 : i32 to vector<1x512xi32>
    %91 = arith.cmpi slt, %87, %90 : vector<1x512xi32>
    %92 = arith.andi %89, %91 : vector<1x512xi1>
    %cst_30 = arith.constant 0.000000e+00 : f32
    %93 = vector.broadcast %cst_30 : f32 to vector<1x512xf32>
    %94 = arith.select %92, %86, %93 : vector<1x512xi1>, vector<1x512xf32>
    %95 = vector.shape_cast %94 : vector<1x512xf32> to vector<1x1x512xf32>
    %cst_31 = arith.constant dense<0.000000e+00> : vector<1xf32>
    %96 = vector.multi_reduction <add>, %95, %cst_31 [1, 2] : vector<1x1x512xf32> to vector<1xf32>
    %97 = vector.shape_cast %96 : vector<1xf32> to vector<1x1x1xf32>
    %98 = vector.extract %97[0, 0, 0] : f32 from vector<1x1x1xf32>
    %cst_32 = arith.constant 7.812500e-03 : f32
    %99 = arith.mulf %98, %cst_32 : f32
    %c128_i32_33 = arith.constant 128 : i32
    %100 = vector.broadcast %c128_i32_33 : i32 to vector<1x512xi32>
    %101 = arith.cmpi sge, %87, %100 : vector<1x512xi32>
    %c256_i32 = arith.constant 256 : i32
    %102 = vector.broadcast %c256_i32 : i32 to vector<1x512xi32>
    %103 = arith.cmpi slt, %87, %102 : vector<1x512xi32>
    %104 = arith.andi %101, %103 : vector<1x512xi1>
    %cst_34 = arith.constant 0.000000e+00 : f32
    %105 = vector.broadcast %cst_34 : f32 to vector<1x512xf32>
    %106 = arith.select %104, %86, %105 : vector<1x512xi1>, vector<1x512xf32>
    %107 = vector.shape_cast %106 : vector<1x512xf32> to vector<1x1x512xf32>
    %cst_35 = arith.constant dense<0.000000e+00> : vector<1xf32>
    %108 = vector.multi_reduction <add>, %107, %cst_35 [1, 2] : vector<1x1x512xf32> to vector<1xf32>
    %109 = vector.shape_cast %108 : vector<1xf32> to vector<1x1x1xf32>
    %110 = vector.extract %109[0, 0, 0] : f32 from vector<1x1x1xf32>
    %cst_36 = arith.constant 7.812500e-03 : f32
    %111 = arith.mulf %110, %cst_36 : f32
    %c256_i32_37 = arith.constant 256 : i32
    %112 = vector.broadcast %c256_i32_37 : i32 to vector<1x512xi32>
    %113 = arith.cmpi sge, %87, %112 : vector<1x512xi32>
    %c384_i32 = arith.constant 384 : i32
    %114 = vector.broadcast %c384_i32 : i32 to vector<1x512xi32>
    %115 = arith.cmpi slt, %87, %114 : vector<1x512xi32>
    %116 = arith.andi %113, %115 : vector<1x512xi1>
    %cst_38 = arith.constant 0.000000e+00 : f32
    %117 = vector.broadcast %cst_38 : f32 to vector<1x512xf32>
    %118 = arith.select %116, %86, %117 : vector<1x512xi1>, vector<1x512xf32>
    %119 = vector.shape_cast %118 : vector<1x512xf32> to vector<1x1x512xf32>
    %cst_39 = arith.constant dense<0.000000e+00> : vector<1xf32>
    %120 = vector.multi_reduction <add>, %119, %cst_39 [1, 2] : vector<1x1x512xf32> to vector<1xf32>
    %121 = vector.shape_cast %120 : vector<1xf32> to vector<1x1x1xf32>
    %122 = vector.extract %121[0, 0, 0] : f32 from vector<1x1x1xf32>
    %cst_40 = arith.constant 7.812500e-03 : f32
    %123 = arith.mulf %122, %cst_40 : f32
    %c384_i32_41 = arith.constant 384 : i32
    %124 = vector.broadcast %c384_i32_41 : i32 to vector<1x512xi32>
    %125 = arith.cmpi sge, %87, %124 : vector<1x512xi32>
    %c512_i32 = arith.constant 512 : i32
    %126 = vector.broadcast %c512_i32 : i32 to vector<1x512xi32>
    %127 = arith.cmpi slt, %87, %126 : vector<1x512xi32>
    %128 = arith.andi %125, %127 : vector<1x512xi1>
    %cst_42 = arith.constant 0.000000e+00 : f32
    %129 = vector.broadcast %cst_42 : f32 to vector<1x512xf32>
    %130 = arith.select %128, %86, %129 : vector<1x512xi1>, vector<1x512xf32>
    %131 = vector.shape_cast %130 : vector<1x512xf32> to vector<1x1x512xf32>
    %cst_43 = arith.constant dense<0.000000e+00> : vector<1xf32>
    %132 = vector.multi_reduction <add>, %131, %cst_43 [1, 2] : vector<1x1x512xf32> to vector<1xf32>
    %133 = vector.shape_cast %132 : vector<1xf32> to vector<1x1x1xf32>
    %134 = vector.extract %133[0, 0, 0] : f32 from vector<1x1x1xf32>
    %cst_44 = arith.constant 7.812500e-03 : f32
    %135 = arith.mulf %134, %cst_44 : f32
    %136 = arith.subf %76, %52 : vector<16x256xf32>
    %137 = math.absf %136 : vector<16x256xf32>
    %138 = tpu.iota {dimensions = array<i32: 1>} : vector<16x256xi32>
    %c128_i32_45 = arith.constant 128 : i32
    %139 = vector.broadcast %c128_i32_45 : i32 to vector<16x256xi32>
    %140 = arith.cmpi slt, %138, %139 : vector<16x256xi32>
    %cst_46 = arith.constant 0.000000e+00 : f32
    %141 = vector.broadcast %cst_46 : f32 to vector<16x256xf32>
    %142 = arith.select %140, %137, %141 : vector<16x256xi1>, vector<16x256xf32>
    %143 = vector.shape_cast %142 : vector<16x256xf32> to vector<1x16x256xf32>
    %cst_47 = arith.constant dense<0.000000e+00> : vector<1xf32>
    %144 = vector.multi_reduction <add>, %143, %cst_47 [1, 2] : vector<1x16x256xf32> to vector<1xf32>
    %145 = vector.shape_cast %144 : vector<1xf32> to vector<1x1x1xf32>
    %146 = vector.extract %145[0, 0, 0] : f32 from vector<1x1x1xf32>
    %cst_48 = arith.constant 4.8828125E-4 : f32
    %147 = arith.mulf %146, %cst_48 : f32
    %c128_i32_49 = arith.constant 128 : i32
    %148 = vector.broadcast %c128_i32_49 : i32 to vector<16x256xi32>
    %149 = arith.cmpi sge, %138, %148 : vector<16x256xi32>
    %cst_50 = arith.constant 0.000000e+00 : f32
    %150 = vector.broadcast %cst_50 : f32 to vector<16x256xf32>
    %151 = arith.select %149, %137, %150 : vector<16x256xi1>, vector<16x256xf32>
    %152 = vector.shape_cast %151 : vector<16x256xf32> to vector<1x16x256xf32>
    %cst_51 = arith.constant dense<0.000000e+00> : vector<1xf32>
    %153 = vector.multi_reduction <add>, %152, %cst_51 [1, 2] : vector<1x16x256xf32> to vector<1xf32>
    %154 = vector.shape_cast %153 : vector<1xf32> to vector<1x1x1xf32>
    %155 = vector.extract %154[0, 0, 0] : f32 from vector<1x1x1xf32>
    %cst_52 = arith.constant 4.8828125E-4 : f32
    %156 = arith.mulf %155, %cst_52 : f32
    %cst_53 = arith.constant 1.000000e+00 : f32
    %157 = arith.subf %99, %cst_53 : f32
    %158 = arith.mulf %157, %157 : f32
    %cst_54 = arith.constant 1.000000e+00 : f32
    %159 = arith.subf %111, %cst_54 : f32
    %160 = arith.mulf %159, %159 : f32
    %161 = arith.mulf %99, %99 : f32
    %cst_55 = arith.constant 1.000000e+00 : f32
    %162 = arith.subf %123, %cst_55 : f32
    %163 = arith.mulf %162, %162 : f32
    %164 = arith.addf %161, %163 : f32
    %cst_56 = arith.constant 5.000000e-01 : f32
    %165 = arith.mulf %cst_56, %164 : f32
    %166 = arith.mulf %111, %111 : f32
    %cst_57 = arith.constant 1.000000e+00 : f32
    %167 = arith.subf %135, %cst_57 : f32
    %168 = arith.mulf %167, %167 : f32
    %169 = arith.addf %166, %168 : f32
    %cst_58 = arith.constant 5.000000e-01 : f32
    %170 = arith.mulf %cst_58, %169 : f32
    %cst_59 = arith.constant 0.000000e+00 : f32
    %171 = vector.broadcast %cst_59 : f32 to vector<1x256xf32>
    %c0_i32_60 = arith.constant 0 : i32
    %172 = vector.broadcast %c0_i32_60 : i32 to vector<1x256xi32>
    %173 = arith.cmpi eq, %0, %172 : vector<1x256xi32>
    %174 = vector.broadcast %99 : f32 to vector<1x256xf32>
    %175 = arith.select %173, %174, %171 : vector<1x256xi1>, vector<1x256xf32>
    %c1_i32 = arith.constant 1 : i32
    %176 = vector.broadcast %c1_i32 : i32 to vector<1x256xi32>
    %177 = arith.cmpi eq, %0, %176 : vector<1x256xi32>
    %178 = vector.broadcast %111 : f32 to vector<1x256xf32>
    %179 = arith.select %177, %178, %175 : vector<1x256xi1>, vector<1x256xf32>
    %c2_i32 = arith.constant 2 : i32
    %180 = vector.broadcast %c2_i32 : i32 to vector<1x256xi32>
    %181 = arith.cmpi eq, %0, %180 : vector<1x256xi32>
    %182 = vector.broadcast %123 : f32 to vector<1x256xf32>
    %183 = arith.select %181, %182, %179 : vector<1x256xi1>, vector<1x256xf32>
    %c3_i32 = arith.constant 3 : i32
    %184 = vector.broadcast %c3_i32 : i32 to vector<1x256xi32>
    %185 = arith.cmpi eq, %0, %184 : vector<1x256xi32>
    %186 = vector.broadcast %135 : f32 to vector<1x256xf32>
    %187 = arith.select %185, %186, %183 : vector<1x256xi1>, vector<1x256xf32>
    %c4_i32 = arith.constant 4 : i32
    %188 = vector.broadcast %c4_i32 : i32 to vector<1x256xi32>
    %189 = arith.cmpi eq, %0, %188 : vector<1x256xi32>
    %190 = vector.broadcast %147 : f32 to vector<1x256xf32>
    %191 = arith.select %189, %190, %187 : vector<1x256xi1>, vector<1x256xf32>
    %c5_i32 = arith.constant 5 : i32
    %192 = vector.broadcast %c5_i32 : i32 to vector<1x256xi32>
    %193 = arith.cmpi eq, %0, %192 : vector<1x256xi32>
    %194 = vector.broadcast %156 : f32 to vector<1x256xf32>
    %195 = arith.select %193, %194, %191 : vector<1x256xi1>, vector<1x256xf32>
    %c6_i32 = arith.constant 6 : i32
    %196 = vector.broadcast %c6_i32 : i32 to vector<1x256xi32>
    %197 = arith.cmpi eq, %0, %196 : vector<1x256xi32>
    %198 = vector.broadcast %158 : f32 to vector<1x256xf32>
    %199 = arith.select %197, %198, %195 : vector<1x256xi1>, vector<1x256xf32>
    %c7_i32 = arith.constant 7 : i32
    %200 = vector.broadcast %c7_i32 : i32 to vector<1x256xi32>
    %201 = arith.cmpi eq, %0, %200 : vector<1x256xi32>
    %202 = vector.broadcast %160 : f32 to vector<1x256xf32>
    %203 = arith.select %201, %202, %199 : vector<1x256xi1>, vector<1x256xf32>
    %c8_i32 = arith.constant 8 : i32
    %204 = vector.broadcast %c8_i32 : i32 to vector<1x256xi32>
    %205 = arith.cmpi eq, %0, %204 : vector<1x256xi32>
    %206 = vector.broadcast %165 : f32 to vector<1x256xf32>
    %207 = arith.select %205, %206, %203 : vector<1x256xi1>, vector<1x256xf32>
    %c9_i32 = arith.constant 9 : i32
    %208 = vector.broadcast %c9_i32 : i32 to vector<1x256xi32>
    %209 = arith.cmpi eq, %0, %208 : vector<1x256xi32>
    %210 = vector.broadcast %170 : f32 to vector<1x256xf32>
    %211 = arith.select %209, %210, %207 : vector<1x256xi1>, vector<1x256xf32>
    %212 = tpu.iota {dimensions = array<i32: 0>} : vector<8x256xi32>
    %c0_i32_61 = arith.constant 0 : i32
    %213 = vector.broadcast %c0_i32_61 : i32 to vector<8x256xi32>
    %214 = arith.cmpi eq, %212, %213 : vector<8x256xi32>
    %c1_i32_62 = arith.constant 1 : i32
    %215 = vector.broadcast %c1_i32_62 : i32 to vector<8x256xi32>
    %216 = arith.cmpi eq, %212, %215 : vector<8x256xi32>
    %c2_i32_63 = arith.constant 2 : i32
    %217 = vector.broadcast %c2_i32_63 : i32 to vector<8x256xi32>
    %218 = arith.cmpi eq, %212, %217 : vector<8x256xi32>
    %cst_64 = arith.constant 0.000000e+00 : f32
    %219 = vector.shape_cast %211 : vector<1x256xf32> to vector<1x256xf32>
    %220 = vector.broadcast %219 : vector<1x256xf32> to vector<8x256xf32>
    %221 = vector.broadcast %cst_64 : f32 to vector<8x256xf32>
    %222 = arith.select %218, %220, %221 : vector<8x256xi1>, vector<8x256xf32>
    %223 = vector.shape_cast %50 : vector<1x256xf32> to vector<1x256xf32>
    %224 = vector.broadcast %223 : vector<1x256xf32> to vector<8x256xf32>
    %225 = arith.select %216, %224, %222 : vector<8x256xi1>, vector<8x256xf32>
    %226 = vector.shape_cast %27 : vector<1x256xf32> to vector<1x256xf32>
    %227 = vector.broadcast %226 : vector<1x256xf32> to vector<8x256xf32>
    %228 = arith.select %214, %227, %225 : vector<8x256xi1>, vector<8x256xf32>
    %c0_65 = arith.constant 0 : index
    %c0_66 = arith.constant 0 : index
    %229 = vector.load %arg7[%c0_65, %c0_66] : memref<8x256xf32, #tpu.memory_space<vmem>>, vector<8x256xf32>
    tpu.vector_store %arg7[%c0_65, %c0_66], %228 {strides = array<i32>} : memref<8x256xf32, #tpu.memory_space<vmem>>, vector<8x256xf32>,
    return
  }
  func.func @transform_0(%arg0: i32) -> i32 {
    %c0_i32 = arith.constant 0 : i32
    %c0_i32_0 = arith.constant 0 : i32
    return %c0_i32 : i32
  }
  func.func @transform_1(%arg0: i32) -> (i32, i32) {
    %c0_i32 = arith.constant 0 : i32
    %c0_i32_0 = arith.constant 0 : i32
    %c0_i32_1 = arith.constant 0 : i32
    return %c0_i32, %c0_i32_0 : i32, i32
  }
  func.func @transform_2(%arg0: i32) -> (i32, i32) {
    %c0_i32 = arith.constant 0 : i32
    %c0_i32_0 = arith.constant 0 : i32
    %c0_i32_1 = arith.constant 0 : i32
    return %c0_i32, %c0_i32_0 : i32, i32
  }
  func.func @transform_3(%arg0: i32) -> (i32, i32) {
    %c0_i32 = arith.constant 0 : i32
    %c0_i32_0 = arith.constant 0 : i32
    %c0_i32_1 = arith.constant 0 : i32
    return %c0_i32, %c0_i32_0 : i32, i32
  }
  func.func @transform_4(%arg0: i32) -> (i32, i32) {
    %c0_i32 = arith.constant 0 : i32
    %c0_i32_0 = arith.constant 0 : i32
    %c0_i32_1 = arith.constant 0 : i32
    return %c0_i32, %c0_i32_0 : i32, i32
  }
  func.func @transform_5(%arg0: i32) -> (i32, i32) {
    %c0_i32 = arith.constant 0 : i32
    %c0_i32_0 = arith.constant 0 : i32
    %c0_i32_1 = arith.constant 0 : i32
    return %c0_i32, %c0_i32_0 : i32, i32
  }
  func.func @transform_6(%arg0: i32) -> (i32, i32) {
    %c0_i32 = arith.constant 0 : i32
    %c0_i32_0 = arith.constant 0 : i32
    %c0_i32_1 = arith.constant 0 : i32
    return %c0_i32, %c0_i32_0 : i32, i32
  }
}

</mosaic_0001>

<llo_original>
// kernel: tpu_custom_call.1
$region0: #{tpu_custom_call.1}
  #allocation0 [shape = 'u32[]', space=smem, size = 0x4, offset = 0x4, fixed_abs, tag = 'smem constant byte address 0x4 - core index']
  #allocation1 [shape = 'u32[144,128]{1,0:T(1,128)}', space=vmem, size = 0x12000, scoped, tag = 'internal scratch']
  %s0 = inlined_call_operand.hbm [shape: f32[18], index: 0, kind: input, shape index: {}]
  %s1 = inlined_call_operand.hbm [shape: f32[2,256], index: 1, kind: input, shape index: {}]
  %s2 = inlined_call_operand.hbm [shape: f32[8,256], index: 2, kind: input, shape index: {}]
  %s3 = inlined_call_operand.hbm [shape: f32[16,256], index: 3, kind: input, shape index: {}]
  %s4 = inlined_call_operand.hbm [shape: f32[88,128], index: 4, kind: input, shape index: {}]
  %s5 = inlined_call_operand.hbm [shape: f32[16,256], index: 5, kind: output, shape index: {0}]
  %s6 = inlined_call_operand.hbm [shape: f32[8,256], index: 6, kind: output, shape index: {1}]
  %7 = xla_tuple %s5, %s6
  %s8 = sld [smem:[#allocation0]]
  $region58: #{tpu_custom_call.1} parent=0
    _
  %s10 = ssub.s32 1, %s8
  %s11 = scalar_select 0, %s10, %s8
  $region1: #{tpu_custom_call.1} parent=0
    #allocation2 [shape = 'u8[512]{0}', space=smem, size = 0x200, scoped, tag = 'input window, operand 0, single buffered']
    #allocation3 [shape = 's32[1]{0}', space=sflag, size = 0x4, scoped, tag = 'scoped memory for tpu_custom_call.1']
    #allocation4 [shape = 's32[1]{0}', space=sflag, size = 0x4, scoped, tag = 'scoped memory for tpu_custom_call.1']
    #allocation5 [shape = 's32[1]{0}', space=sflag, size = 0x4, scoped, tag = 'scoped memory for tpu_custom_call.1']
    #allocation6 [shape = 'u8[2048]{0}', space=vmem, size = 0x800, scoped, tag = 'input window, operand 1, single buffered']
    #allocation7 [shape = 'u8[8192]{0}', space=vmem, size = 0x2000, scoped, tag = 'input window, operand 2, single buffered']
    #allocation8 [shape = 's32[1]{0}', space=sflag, size = 0x4, scoped, tag = 'scoped memory for tpu_custom_call.1']
    #allocation9 [shape = 'u8[16384]{0}', space=vmem, size = 0x4000, scoped, tag = 'input window, operand 3, single buffered']
    #allocation10 [shape = 'u8[45056]{0}', space=vmem, size = 0xb000, scoped, tag = 'input window, operand 4, single buffered']
    #allocation11 [shape = 's32[1]{0}', space=sflag, size = 0x4, scoped, tag = 'scoped memory for tpu_custom_call.1']
    #allocation12 [shape = 'u8[16384]{0}', space=vmem, size = 0x4000, scoped, tag = 'output window, operand 0, single buffered']
    #allocation13 [shape = 'u8[8192]{0}', space=vmem, size = 0x2000, scoped, tag = 'output window, operand 1, single buffered']
    #allocation14 [shape = 's32[1]{0}', space=sflag, size = 0x4, scoped, tag = 'scoped memory for tpu_custom_call.1']
    %12 = vsyncpa [#allocation5], 0
    %13 = vsyncpa [#allocation3], 0
    %14 = vsyncpa [#allocation8], 0
    %15 = vsyncpa [#allocation11], 0
    %16 = vsyncpa [#allocation4], 0
    %17 = vsyncpa [#allocation14], 0
    // Predicated region
    $region2: #{tpu_custom_call.1} parent=1 // pred_check
      _
    $region3: #{tpu_custom_call.1} parent=1 // pred_check_branch
      %19 = sbr.rel (0) target = $region5
    $region4: #{tpu_custom_call.1} parent=1 // pred_region
      %s21 = ssub.s32 16, 16
      %22 = vsyncadd [#allocation5], %s21
      %25 = dma.hbm_to_smem %s0, 16, [#allocation2], [#allocation5]
    $region5: #{tpu_custom_call.1} parent=1 // pred_fallthru
      _
    // Predicated region
    $region6: #{tpu_custom_call.1} parent=1 // pred_check
      _
    $region7: #{tpu_custom_call.1} parent=1 // pred_check_branch
      %27 = sbr.rel (0) target = $region9
    $region8: #{tpu_custom_call.1} parent=1 // pred_region
      %s29 = ssub.s32 64, 64
      %30 = vsyncadd [#allocation3], %s29
      %s32 = sshll.u32 [#allocation6], 4
      %s33 = int_to_ptr.vmem [resolvable:$true] %s32
      %35 = dma.hbm_to_vmem [thread:$0]  %s1, 64, %s33, [#allocation3]
    $region9: #{tpu_custom_call.1} parent=1 // pred_fallthru
      _
    // Predicated region
    $region10: #{tpu_custom_call.1} parent=1 // pred_check
      _
    $region11: #{tpu_custom_call.1} parent=1 // pred_check_branch
      %37 = sbr.rel (0) target = $region13
    $region12: #{tpu_custom_call.1} parent=1 // pred_region
      %s39 = ssub.s32 256, 256
      %40 = vsyncadd [#allocation8], %s39
      %s42 = sshll.u32 [#allocation7], 4
      %s43 = int_to_ptr.vmem [resolvable:$true] %s42
      %45 = dma.hbm_to_vmem [thread:$0]  %s2, 256, %s43, [#allocation8]
    $region13: #{tpu_custom_call.1} parent=1 // pred_fallthru
      _
    // Predicated region
    $region14: #{tpu_custom_call.1} parent=1 // pred_check
      _
    $region15: #{tpu_custom_call.1} parent=1 // pred_check_branch
      %47 = sbr.rel (0) target = $region17
    $region16: #{tpu_custom_call.1} parent=1 // pred_region
      %s49 = ssub.s32 512, 512
      %50 = vsyncadd [#allocation8], %s49
      %s51 = sshll.u32 [#allocation9], 4
      %s52 = int_to_ptr.vmem [resolvable:$true] %s51
      %57 = dma.hbm_to_vmem [thread:$0]  %s3, 512, %s52, [#allocation8], 256, 256, 16
    $region17: #{tpu_custom_call.1} parent=1 // pred_fallthru
      _
    // Predicated region
    $region18: #{tpu_custom_call.1} parent=1 // pred_check
      _
    $region19: #{tpu_custom_call.1} parent=1 // pred_check_branch
      %59 = sbr.rel (0) target = $region21
    $region20: #{tpu_custom_call.1} parent=1 // pred_region
      %s61 = ssub.s32 1408, 1408
      %62 = vsyncadd [#allocation11], %s61
      %s63 = sshll.u32 [#allocation10], 4
      %s64 = int_to_ptr.vmem [resolvable:$true] %s63
      %69 = dma.hbm_to_vmem [thread:$0]  %s4, 1408, %s64, [#allocation11], 128, 128, 8
    $region21: #{tpu_custom_call.1} parent=1 // pred_fallthru
      _
    // Predicated region
    $region22: #{tpu_custom_call.1} parent=1 // pred_check
      _
    $region23: #{tpu_custom_call.1} parent=1 // pred_check_branch
      %71 = sbr.rel (0) target = $region25
    $region24: #{tpu_custom_call.1} parent=1 // pred_region
      %72 = dma.done [#allocation5], 16
    $region25: #{tpu_custom_call.1} parent=1 // pred_fallthru
      _
    // Predicated region
    $region26: #{tpu_custom_call.1} parent=1 // pred_check
      _
    $region27: #{tpu_custom_call.1} parent=1 // pred_check_branch
      %74 = sbr.rel (0) target = $region29
    $region28: #{tpu_custom_call.1} parent=1 // pred_region
      %75 = dma.done [#allocation3], 64
    $region29: #{tpu_custom_call.1} parent=1 // pred_fallthru
      _
    // Predicated region
    $region30: #{tpu_custom_call.1} parent=1 // pred_check
      _
    $region31: #{tpu_custom_call.1} parent=1 // pred_check_branch
      %77 = sbr.rel (0) target = $region33
    $region32: #{tpu_custom_call.1} parent=1 // pred_region
      %78 = dma.done [#allocation8], 256
    $region33: #{tpu_custom_call.1} parent=1 // pred_fallthru
      _
    // Predicated region
    $region34: #{tpu_custom_call.1} parent=1 // pred_check
      _
    $region35: #{tpu_custom_call.1} parent=1 // pred_check_branch
      %80 = sbr.rel (0) target = $region37
    $region36: #{tpu_custom_call.1} parent=1 // pred_region
      %81 = dma.done [#allocation8], 512
    $region37: #{tpu_custom_call.1} parent=1 // pred_fallthru
      _
    // Predicated region
    $region38: #{tpu_custom_call.1} parent=1 // pred_check
      _
    $region39: #{tpu_custom_call.1} parent=1 // pred_check_branch
      %83 = sbr.rel (0) target = $region41
    $region40: #{tpu_custom_call.1} parent=1 // pred_region
      %84 = dma.done [#allocation11], 1408
    $region41: #{tpu_custom_call.1} parent=1 // pred_fallthru
      _
    %85 = sfence
    %v86 = vlaneseq
    %v87 = vand.u32 %v86, 127
    %v88 = vadd.s32 %v87, 128
    %vm89 = vcmp.ge.s32.totalorder %v87, 128
    %vm90 = vcmp.ge.s32.totalorder %v88, 128
    %v91 = vld [vmem:[#allocation6] ss:$2 sm:$0x3]
    %s92 = scalar_lea.vmem [#allocation6], 1
    %v93 = vld [vmem:[%s92] ss:$2 sm:$0x3]
    %vm94 = vcmp.lt.f32.partialorder %v91, 0.0
    %s95 = sld [smem:[#allocation2 + $0x9]]
    %s96 = sld [smem:[#allocation2]]
    %v97 = vstv %s95
    %v98 = vstv %s96
    %v99 = vsel %vm89, %v97, %v98
    %v100 = vsel %vm90, %v97, %v98
    %v102 = vlaneseq
    %v103 = vshrl.u32 %v102, 7
    %v104 = vsub.s32 0, %v103
    %v105 = vrot.slane %v91, %v104
    %v106 = vlaneseq
    %v107 = vshrl.u32 %v106, 7
    %v108 = vsub.s32 1, %v107
    %v109 = vrot.slane %v91, %v108
    %v112 = vmul.f32 %v99, %v105
    %v113 = vmul.f32 %v100, %v109
    %s114 = sld [smem:[#allocation2 + $0xa]]
    %s115 = sld [smem:[#allocation2 + $0x1]]
    %v116 = vstv %s114
    %v117 = vstv %s115
    %v118 = vsel %vm89, %v116, %v117
    %v119 = vsel %vm90, %v116, %v117
    %v121 = vlaneseq
    %v122 = vshrl.u32 %v121, 7
    %v123 = vsub.s32 0, %v122
    %v124 = vrot.slane %v93, %v123
    %v125 = vlaneseq
    %v126 = vshrl.u32 %v125, 7
    %v127 = vsub.s32 1, %v126
    %v128 = vrot.slane %v93, %v127
    %v131 = vmul.f32 %v118, %v124
    %v132 = vmul.f32 %v119, %v128
    %v133 = vadd.f32 %v112, %v131
    %v134 = vadd.f32 %v113, %v132
    %s135 = sld [smem:[#allocation2 + $0xb]]
    %s136 = sld [smem:[#allocation2 + $0x2]]
    %v137 = vstv %s135
    %v138 = vstv %s136
    %v139 = vsel %vm89, %v137, %v138
    %v140 = vsel %vm90, %v137, %v138
    %v141 = vadd.f32 %v133, %v139
    %v142 = vadd.f32 %v134, %v140
    %v145 = vcombine.low %v141, %v142
    %v147 = vunpack.c.l.s4 1966171168
    %v148 = vunpack.c.0.s8 %v147
    %v149 = vlaneseq
    %v150 = vshrl.u32 %v149, 7
    %v151 = vsub.s32 %v148, %v150
    %v152 = vrot.slane %v145, %v151
    %v154 = vunpack.c.l.s4 1966171168
    %v155 = vunpack.c.0.s8 %v154
    %v156 = vlaneseq
    %v157 = vshrl.u32 %v156, 7
    %v158 = vsub.s32 %v155, %v157
    %v159 = vrot.slane %v152, %v158
    %v161 = vsel %vm94, -1.0, %v159
    %vm162 = vcmp.lt.f32.partialorder %v93, 0.0
    %s163 = sld [smem:[#allocation2 + $0xc]]
    %s164 = sld [smem:[#allocation2 + $0x3]]
    %v165 = vstv %s163
    %v166 = vstv %s164
    %v167 = vsel %vm89, %v165, %v166
    %v168 = vsel %vm90, %v165, %v166
    %v169 = vmul.f32 %v167, %v105
    %v170 = vmul.f32 %v168, %v109
    %s171 = sld [smem:[#allocation2 + $0xd]]
    %s172 = sld [smem:[#allocation2 + $0x4]]
    %v173 = vstv %s171
    %v174 = vstv %s172
    %v175 = vsel %vm89, %v173, %v174
    %v176 = vsel %vm90, %v173, %v174
    %v177 = vmul.f32 %v175, %v124
    %v178 = vmul.f32 %v176, %v128
    %v179 = vadd.f32 %v169, %v177
    %v180 = vadd.f32 %v170, %v178
    %s181 = sld [smem:[#allocation2 + $0xe]]
    %s182 = sld [smem:[#allocation2 + $0x5]]
    %v183 = vstv %s181
    %v184 = vstv %s182
    %v185 = vsel %vm89, %v183, %v184
    %v186 = vsel %vm90, %v183, %v184
    %v187 = vadd.f32 %v179, %v185
    %v188 = vadd.f32 %v180, %v186
    %v191 = vcombine.low %v187, %v188
    %v193 = vunpack.c.l.s4 1966171168
    %v194 = vunpack.c.0.s8 %v193
    %v195 = vlaneseq
    %v196 = vshrl.u32 %v195, 7
    %v197 = vsub.s32 %v194, %v196
    %v198 = vrot.slane %v191, %v197
    %v200 = vunpack.c.l.s4 1966171168
    %v201 = vunpack.c.0.s8 %v200
    %v202 = vlaneseq
    %v203 = vshrl.u32 %v202, 7
    %v204 = vsub.s32 %v201, %v203
    %v205 = vrot.slane %v198, %v204
    %v207 = vsel %vm162, -1.0, %v205
    %v208 = vld [vmem:[#allocation7] sm:$0xff]
    %v209 = vld [vmem:[#allocation7 + $0x8] sm:$0xff]
    %v210 = vld [vmem:[#allocation9] sm:$0xff]
    %v211 = vld [vmem:[#allocation9 + $0x8] sm:$0xff]
    %v212 = vld [vmem:[#allocation9 + $0x10] sm:$0xff]
    %v213 = vld [vmem:[#allocation9 + $0x18] sm:$0xff]
    %v214 = vld [vmem:[#allocation10] sm:$0xff]
    %v215 = vld [vmem:[#allocation10 + $0x8] sm:$0xff]
    %v216 = vld [vmem:[#allocation10 + $0x10] sm:$0xff]
    %v217 = vld [vmem:[#allocation10 + $0x18] sm:$0xff]
    %v218 = vld [vmem:[#allocation10 + $0x20] sm:$0xff]
    %v219 = vld [vmem:[#allocation10 + $0x28] sm:$0xff]
    %v220 = vld [vmem:[#allocation10 + $0x30] sm:$0xff]
    %v221 = vld [vmem:[#allocation10 + $0x38] sm:$0xff]
    %v222 = vld [vmem:[#allocation10 + $0x40] sm:$0xff]
    %v223 = vld [vmem:[#allocation10 + $0x48] sm:$0xff]
    %v224 = vld [vmem:[#allocation10 + $0x50] sm:$0x1]
    %226 = vset.pattern.permute.xlu0 0
    %227 = vperm.xlu0 %226, %v214
    %v228 = vpop.permute.xlu0 %227
    %231 = vset.pattern.permute.xlu0 0
    %232 = vperm.xlu0 %231, %v215
    %v233 = vpop.permute.xlu0 %232
    %236 = vset.pattern.permute.xlu0 0
    %237 = vperm.xlu0 %236, %v216
    %v238 = vpop.permute.xlu0 %237
    %241 = vset.pattern.permute.xlu0 0
    %242 = vperm.xlu0 %241, %v217
    %v243 = vpop.permute.xlu0 %242
    %v246 = vlaneseq
    %v247 = vshrl.u32 %v246, 7
    %v248 = vsub.s32 0, %v247
    %v249 = vrot.slane %v161, %v248
    %v250 = vlaneseq
    %v251 = vshrl.u32 %v250, 7
    %v252 = vsub.s32 1, %v251
    %v253 = vrot.slane %v161, %v252
    %v256 = vmul.f32 %v228, %v249
    %v257 = vmul.f32 %v228, %v253
    %v258 = vmul.f32 %v233, %v249
    %v259 = vmul.f32 %v233, %v253
    %v260 = vmul.f32 %v238, %v249
    %v261 = vmul.f32 %v238, %v253
    %v262 = vmul.f32 %v243, %v249
    %v263 = vmul.f32 %v243, %v253
    %264 = vset.pattern.permute.xlu0 1
    %265 = vperm.xlu0 %264, %v214
    %v266 = vpop.permute.xlu0 %265
    %268 = vset.pattern.permute.xlu0 1
    %269 = vperm.xlu0 %268, %v215
    %v270 = vpop.permute.xlu0 %269
    %272 = vset.pattern.permute.xlu0 1
    %273 = vperm.xlu0 %272, %v216
    %v274 = vpop.permute.xlu0 %273
    %276 = vset.pattern.permute.xlu0 1
    %277 = vperm.xlu0 %276, %v217
    %v278 = vpop.permute.xlu0 %277
    %v281 = vlaneseq
    %v282 = vshrl.u32 %v281, 7
    %v283 = vsub.s32 0, %v282
    %v284 = vrot.slane %v207, %v283
    %v285 = vlaneseq
    %v286 = vshrl.u32 %v285, 7
    %v287 = vsub.s32 1, %v286
    %v288 = vrot.slane %v207, %v287
    %v291 = vmul.f32 %v266, %v284
    %v292 = vmul.f32 %v266, %v288
    %v293 = vmul.f32 %v270, %v284
    %v294 = vmul.f32 %v270, %v288
    %v295 = vmul.f32 %v274, %v284
    %v296 = vmul.f32 %v274, %v288
    %v297 = vmul.f32 %v278, %v284
    %v298 = vmul.f32 %v278, %v288
    %v299 = vadd.f32 %v256, %v291
    %v300 = vadd.f32 %v257, %v292
    %v301 = vadd.f32 %v258, %v293
    %v302 = vadd.f32 %v259, %v294
    %v303 = vadd.f32 %v260, %v295
    %v304 = vadd.f32 %v261, %v296
    %v305 = vadd.f32 %v262, %v297
    %v306 = vadd.f32 %v263, %v298
    %307 = vset.pattern.permute.xlu0 2
    %308 = vperm.xlu0 %307, %v214
    %v309 = vpop.permute.xlu0 %308
    %311 = vset.pattern.permute.xlu0 2
    %312 = vperm.xlu0 %311, %v215
    %v313 = vpop.permute.xlu0 %312
    %315 = vset.pattern.permute.xlu0 2
    %316 = vperm.xlu0 %315, %v216
    %v317 = vpop.permute.xlu0 %316
    %319 = vset.pattern.permute.xlu0 2
    %320 = vperm.xlu0 %319, %v217
    %v321 = vpop.permute.xlu0 %320
    %v323 = vadd.f32 %v299, %v309
    %v324 = vadd.f32 %v300, %v309
    %v325 = vadd.f32 %v301, %v313
    %v326 = vadd.f32 %v302, %v313
    %v327 = vadd.f32 %v303, %v317
    %v328 = vadd.f32 %v304, %v317
    %v329 = vadd.f32 %v305, %v321
    %v330 = vadd.f32 %v306, %v321
    %v331 = vmax.f32 %v323, 0.0
    %v332 = vmax.f32 %v324, 0.0
    %v333 = vmax.f32 %v325, 0.0
    %v334 = vmax.f32 %v326, 0.0
    %v335 = vmax.f32 %v327, 0.0
    %v336 = vmax.f32 %v328, 0.0
    %v337 = vmax.f32 %v329, 0.0
    %v338 = vmax.f32 %v330, 0.0
    %340 = vset.pattern.permute.xlu0 40
    %341 = vperm.xlu0 %340, %v218
    %v342 = vpop.permute.xlu0 %341
    %345 = vset.pattern.permute.xlu0 40
    %346 = vperm.xlu0 %345, %v219
    %v347 = vpop.permute.xlu0 %346
    %vm349 = vcmask 326656
    %v350 = vsel %vm349, %v218, 0
    %v352 = vsel %vm349, %v219, 0
    %354 = vmatprep.subr.mxu0 %v332
    %355 = vmatpush1.msra.mxu0 %v331
    %356 = vmatprep.subr.mxu0 %v334
    %357 = vmatpush1.msra.mxu0 %v333
    %358 = vmatprep.subr.mxu0 %v336
    %359 = vmatpush1.msra.mxu0 %v335
    %360 = vmatprep.subr.mxu0 %v338
    %361 = vmatpush1.msra.mxu0 %v337
    %362 = vmatprep.subr.mxu0 %v209
    %363 = vmatpush1.msra.mxu0 %v208
    %364 = vmatprep.subr.mxu0 0.0
    %365 = vmatpush1.msra.mxu0 0.0
    %366 = vmatprep.subr.mxu0 0.0
    %367 = vmatpush1.msra.mxu0 0.0
    %368 = vmatprep.subr.mxu0 0.0
    %369 = vmatpush1.msra.mxu0 0.0
    %370 = vmatprep.subr.mxu0 0.0
    %371 = vmatpush1.msra.mxu0 0.0
    %372 = vmatprep.subr.mxu0 0.0
    %373 = vmatpush1.msra.mxu0 0.0
    %374 = vmatprep.subr.mxu0 0.0
    %375 = vmatpush1.msra.mxu0 0.0
    %376 = vmatprep.subr.mxu0 0.0
    %377 = vmatpush1.msra.mxu0 0.0
    %378 = vmatprep.subr.mxu0 0.0
    %379 = vmatpush1.msra.mxu0 0.0
    %380 = vmatprep.subr.mxu0 0.0
    %381 = vmatpush1.msra.mxu0 0.0
    %382 = vmatprep.subr.mxu0 0.0
    %383 = vmatpush1.msra.mxu0 0.0
    %384 = vmatprep.subr.mxu0 0.0
    %385 = vmatpush1.msra.mxu0 0.0
    %386 = vmatprep.subr.mxu0 0.0
    %387 = vmatpush1.msra.mxu0 0.0
    %388 = vmatprep.subr.mxu0 0.0
    %389 = vmatpush1.msra.mxu0 0.0
    %390 = vmatprep.subr.mxu0 0.0
    %391 = vmatpush1.msra.mxu0 0.0
    %392 = vmatprep.subr.mxu0 0.0
    %393 = vmatpush1.msra.mxu0 0.0
    %394 = vmatprep.subr.mxu0 0.0
    %395 = vmatpush1.msra.mxu0 0.0
    %396 = vmatprep.subr.mxu0 0.0
    %397 = vmatpush1.msra.mxu0 0.0
    %398 = vmatprep.subr.mxu0 0.0
    %399 = vmatpush1.msra.mxu0 0.0
    %400 = vmatprep.subr.mxu0 0.0
    %401 = vmatpush1.msra.mxu0 0.0
    %402 = vmatprep.subr.mxu0 0.0
    %403 = vmatpush1.msra.mxu0 0.0
    %404 = vmatprep.subr.mxu0 0.0
    %405 = vmatpush1.msra.mxu0 0.0
    %406 = vmatprep.subr.mxu0 0.0
    %407 = vmatpush1.msra.mxu0 0.0
    %408 = vmatprep.subr.mxu0 0.0
    %409 = vmatpush1.msra.mxu0 0.0
    %410 = vmatprep.subr.mxu0 0.0
    %411 = vmatpush1.msra.mxu0 0.0
    %412 = vmatprep.subr.mxu0 0.0
    %413 = vmatpush1.msra.mxu0 0.0
    %414 = vmatprep.subr.mxu0 0.0
    %415 = vmatpush1.msra.mxu0 0.0
    %416 = vmatprep.subr.mxu0 0.0
    %417 = vmatpush1.msra.mxu0 0.0
    %418 = vmatprep.mubr.f32.mxu0 0.0
    %419 = vmatmul.mubr.f32.gmra.mrb[0].mxu0 %v350
    %v420 = vpop.f32.mrb[0].mxu0
    %v421 = vadd.f32 %v342, %v420
    %v422 = vpop.f32.mrb[0].mxu0
    %v423 = vadd.f32 %v342, %v422
    %424 = vmatprep.mubr.f32.mxu0 0.0
    %425 = vmatmul.mubr.f32.gmra.mrb[0].mxu0 %v352
    %v426 = vpop.f32.mrb[0].mxu0
    %v427 = vadd.f32 %v347, %v426
    %v428 = vpop.f32.mrb[0].mxu0
    %v429 = vadd.f32 %v347, %v428
    %430 = vdwg.mxu0
    %v431 = vtanh.pop %v421
    %v432 = vtanh.pop %v423
    %v433 = vtanh.pop %v427
    %v434 = vtanh.pop %v429
    %435 = vst [vmem:[#allocation12] sm:$0xff] %v431
    %436 = vst [vmem:[#allocation12 + $0x8] sm:$0xff] %v432
    %437 = vst [vmem:[#allocation12 + $0x10] sm:$0xff] %v433
    %438 = vst [vmem:[#allocation12 + $0x18] sm:$0xff] %v434
    %440 = vset.pattern.permute.xlu0 24
    %441 = vperm.xlu0 %440, %v220
    %v442 = vpop.permute.xlu0 %441
    %445 = vset.pattern.permute.xlu0 24
    %446 = vperm.xlu0 %445, %v221
    %v447 = vpop.permute.xlu0 %446
    %450 = vset.pattern.permute.xlu0 24
    %451 = vperm.xlu0 %450, %v222
    %v452 = vpop.permute.xlu0 %451
    %455 = vset.pattern.permute.xlu0 24
    %456 = vperm.xlu0 %455, %v223
    %v457 = vpop.permute.xlu0 %456
    %vm459 = vcmask 195584
    %v460 = vsel %vm459, %v220, 0
    %v462 = vsel %vm459, %v221, 0
    %v464 = vsel %vm459, %v222, 0
    %v466 = vsel %vm459, %v223, 0
    %468 = vmatprep.subr.mxu0 %v432
    %469 = vmatpush1.msra.mxu0 %v431
    %470 = vmatprep.subr.mxu0 %v434
    %471 = vmatpush1.msra.mxu0 %v433
    %472 = vmatprep.subr.mxu0 %v209
    %473 = vmatpush1.msra.mxu0 %v208
    %474 = vmatprep.subr.mxu0 0.0
    %475 = vmatpush1.msra.mxu0 0.0
    %476 = vmatprep.subr.mxu0 0.0
    %477 = vmatpush1.msra.mxu0 0.0
    %478 = vmatprep.subr.mxu0 0.0
    %479 = vmatpush1.msra.mxu0 0.0
    %480 = vmatprep.subr.mxu0 0.0
    %481 = vmatpush1.msra.mxu0 0.0
    %482 = vmatprep.subr.mxu0 0.0
    %483 = vmatpush1.msra.mxu0 0.0
    %484 = vmatprep.subr.mxu0 0.0
    %485 = vmatpush1.msra.mxu0 0.0
    %486 = vmatprep.subr.mxu0 0.0
    %487 = vmatpush1.msra.mxu0 0.0
    %488 = vmatprep.subr.mxu0 0.0
    %489 = vmatpush1.msra.mxu0 0.0
    %490 = vmatprep.subr.mxu0 0.0
    %491 = vmatpush1.msra.mxu0 0.0
    %492 = vmatprep.subr.mxu0 0.0
    %493 = vmatpush1.msra.mxu0 0.0
    %494 = vmatprep.subr.mxu0 0.0
    %495 = vmatpush1.msra.mxu0 0.0
    %496 = vmatprep.subr.mxu0 0.0
    %497 = vmatpush1.msra.mxu0 0.0
    %498 = vmatprep.subr.mxu0 0.0
    %499 = vmatpush1.msra.mxu0 0.0
    %500 = vmatprep.subr.mxu0 0.0
    %501 = vmatpush1.msra.mxu0 0.0
    %502 = vmatprep.subr.mxu0 0.0
    %503 = vmatpush1.msra.mxu0 0.0
    %504 = vmatprep.subr.mxu0 0.0
    %505 = vmatpush1.msra.mxu0 0.0
    %506 = vmatprep.subr.mxu0 0.0
    %507 = vmatpush1.msra.mxu0 0.0
    %508 = vmatprep.subr.mxu0 0.0
    %509 = vmatpush1.msra.mxu0 0.0
    %510 = vmatprep.subr.mxu0 0.0
    %511 = vmatpush1.msra.mxu0 0.0
    %512 = vmatprep.subr.mxu0 0.0
    %513 = vmatpush1.msra.mxu0 0.0
    %514 = vmatprep.subr.mxu0 0.0
    %515 = vmatpush1.msra.mxu0 0.0
    %516 = vmatprep.subr.mxu0 0.0
    %517 = vmatpush1.msra.mxu0 0.0
    %518 = vmatprep.subr.mxu0 0.0
    %519 = vmatpush1.msra.mxu0 0.0
    %520 = vmatprep.subr.mxu0 0.0
    %521 = vmatpush1.msra.mxu0 0.0
    %522 = vmatprep.subr.mxu0 0.0
    %523 = vmatpush1.msra.mxu0 0.0
    %524 = vmatprep.subr.mxu0 0.0
    %525 = vmatpush1.msra.mxu0 0.0
    %526 = vmatprep.subr.mxu0 0.0
    %527 = vmatpush1.msra.mxu0 0.0
    %528 = vmatprep.subr.mxu0 0.0
    %529 = vmatpush1.msra.mxu0 0.0
    %530 = vmatprep.subr.mxu0 0.0
    %531 = vmatpush1.msra.mxu0 0.0
    %532 = vmatprep.mubr.f32.mxu0 0.0
    %533 = vmatmul.mubr.f32.gmra.mrb[0].mxu0 %v460
    %v534 = vpop.f32.mrb[0].mxu0
    %v535 = vadd.f32 %v442, %v534
    %v536 = vpop.f32.mrb[0].mxu0
    %v537 = vadd.f32 %v442, %v536
    %538 = vmatprep.mubr.f32.mxu0 0.0
    %539 = vmatmul.mubr.f32.gmra.mrb[0].mxu0 %v462
    %v540 = vpop.f32.mrb[0].mxu0
    %v541 = vadd.f32 %v447, %v540
    %v542 = vpop.f32.mrb[0].mxu0
    %v543 = vadd.f32 %v447, %v542
    %544 = vmatprep.mubr.f32.mxu0 0.0
    %545 = vmatmul.mubr.f32.gmra.mrb[0].mxu0 %v464
    %v546 = vpop.f32.mrb[0].mxu0
    %v547 = vadd.f32 %v452, %v546
    %v548 = vpop.f32.mrb[0].mxu0
    %v549 = vadd.f32 %v452, %v548
    %550 = vmatprep.mubr.f32.mxu0 0.0
    %551 = vmatmul.mubr.f32.gmra.mrb[0].mxu0 %v466
    %v552 = vpop.f32.mrb[0].mxu0
    %v553 = vadd.f32 %v457, %v552
    %v554 = vpop.f32.mrb[0].mxu0
    %v555 = vadd.f32 %v457, %v554
    %556 = vdwg.mxu0
    %557 = vmatprep.subr.mxu0 %v211
    %558 = vmatpush1.msra.mxu0 %v210
    %559 = vmatprep.subr.mxu0 %v213
    %560 = vmatpush1.msra.mxu0 %v212
    %561 = vmatprep.subr.mxu0 %v209
    %562 = vmatpush1.msra.mxu0 %v208
    %563 = vmatprep.subr.mxu0 0.0
    %564 = vmatpush1.msra.mxu0 0.0
    %565 = vmatprep.subr.mxu0 0.0
    %566 = vmatpush1.msra.mxu0 0.0
    %567 = vmatprep.subr.mxu0 0.0
    %568 = vmatpush1.msra.mxu0 0.0
    %569 = vmatprep.subr.mxu0 0.0
    %570 = vmatpush1.msra.mxu0 0.0
    %571 = vmatprep.subr.mxu0 0.0
    %572 = vmatpush1.msra.mxu0 0.0
    %573 = vmatprep.subr.mxu0 0.0
    %574 = vmatpush1.msra.mxu0 0.0
    %575 = vmatprep.subr.mxu0 0.0
    %576 = vmatpush1.msra.mxu0 0.0
    %577 = vmatprep.subr.mxu0 0.0
    %578 = vmatpush1.msra.mxu0 0.0
    %579 = vmatprep.subr.mxu0 0.0
    %580 = vmatpush1.msra.mxu0 0.0
    %581 = vmatprep.subr.mxu0 0.0
    %582 = vmatpush1.msra.mxu0 0.0
    %583 = vmatprep.subr.mxu0 0.0
    %584 = vmatpush1.msra.mxu0 0.0
    %585 = vmatprep.subr.mxu0 0.0
    %586 = vmatpush1.msra.mxu0 0.0
    %587 = vmatprep.subr.mxu0 0.0
    %588 = vmatpush1.msra.mxu0 0.0
    %589 = vmatprep.subr.mxu0 0.0
    %590 = vmatpush1.msra.mxu0 0.0
    %591 = vmatprep.subr.mxu0 0.0
    %592 = vmatpush1.msra.mxu0 0.0
    %593 = vmatprep.subr.mxu0 0.0
    %594 = vmatpush1.msra.mxu0 0.0
    %595 = vmatprep.subr.mxu0 0.0
    %596 = vmatpush1.msra.mxu0 0.0
    %597 = vmatprep.subr.mxu0 0.0
    %598 = vmatpush1.msra.mxu0 0.0
    %599 = vmatprep.subr.mxu0 0.0
    %600 = vmatpush1.msra.mxu0 0.0
    %601 = vmatprep.subr.mxu0 0.0
    %602 = vmatpush1.msra.mxu0 0.0
    %603 = vmatprep.subr.mxu0 0.0
    %604 = vmatpush1.msra.mxu0 0.0
    %605 = vmatprep.subr.mxu0 0.0
    %606 = vmatpush1.msra.mxu0 0.0
    %607 = vmatprep.subr.mxu0 0.0
    %608 = vmatpush1.msra.mxu0 0.0
    %609 = vmatprep.subr.mxu0 0.0
    %610 = vmatpush1.msra.mxu0 0.0
    %611 = vmatprep.subr.mxu0 0.0
    %612 = vmatpush1.msra.mxu0 0.0
    %613 = vmatprep.subr.mxu0 0.0
    %614 = vmatpush1.msra.mxu0 0.0
    %615 = vmatprep.subr.mxu0 0.0
    %616 = vmatpush1.msra.mxu0 0.0
    %617 = vmatprep.subr.mxu0 0.0
    %618 = vmatpush1.msra.mxu0 0.0
    %619 = vmatprep.subr.mxu0 0.0
    %620 = vmatpush1.msra.mxu0 0.0
    %621 = vmatprep.mubr.f32.mxu0 0.0
    %622 = vmatmul.mubr.f32.gmra.mrb[0].mxu0 %v460
    %v623 = vpop.f32.mrb[0].mxu0
    %v624 = vadd.f32 %v442, %v623
    %v625 = vpop.f32.mrb[0].mxu0
    %v626 = vadd.f32 %v442, %v625
    %627 = vmatprep.mubr.f32.mxu0 0.0
    %628 = vmatmul.mubr.f32.gmra.mrb[0].mxu0 %v462
    %v629 = vpop.f32.mrb[0].mxu0
    %v630 = vadd.f32 %v447, %v629
    %v631 = vpop.f32.mrb[0].mxu0
    %v632 = vadd.f32 %v447, %v631
    %633 = vmatprep.mubr.f32.mxu0 0.0
    %634 = vmatmul.mubr.f32.gmra.mrb[0].mxu0 %v464
    %v635 = vpop.f32.mrb[0].mxu0
    %v636 = vadd.f32 %v452, %v635
    %v637 = vpop.f32.mrb[0].mxu0
    %v638 = vadd.f32 %v452, %v637
    %639 = vmatprep.mubr.f32.mxu0 0.0
    %640 = vmatmul.mubr.f32.gmra.mrb[0].mxu0 %v466
    %v641 = vpop.f32.mrb[0].mxu0
    %v642 = vadd.f32 %v457, %v641
    %v643 = vpop.f32.mrb[0].mxu0
    %v644 = vadd.f32 %v457, %v643
    %645 = vdwg.mxu0
    %v646 = vmax.f32 %v535, 0.0
    %v647 = vmax.f32 %v537, 0.0
    %v648 = vmax.f32 %v624, 0.0
    %v649 = vmax.f32 %v626, 0.0
    %v650 = vmax.f32 %v541, 0.0
    %v651 = vmax.f32 %v543, 0.0
    %v652 = vmax.f32 %v630, 0.0
    %v653 = vmax.f32 %v632, 0.0
    %v654 = vmax.f32 %v547, 0.0
    %v655 = vmax.f32 %v549, 0.0
    %v656 = vmax.f32 %v636, 0.0
    %v657 = vmax.f32 %v638, 0.0
    %v658 = vmax.f32 %v553, 0.0
    %v659 = vmax.f32 %v555, 0.0
    %v660 = vmax.f32 %v642, 0.0
    %v661 = vmax.f32 %v644, 0.0
    %vm662 = vcmask 261120
    %v664 = vsel %vm662, %v224, 0
    %666 = vmatprep.subr.mxu0 %v647
    %667 = vmatpush1.msra.mxu0 %v646
    %668 = vmatprep.subr.mxu0 %v651
    %669 = vmatpush1.msra.mxu0 %v650
    %670 = vmatprep.subr.mxu0 %v655
    %671 = vmatpush1.msra.mxu0 %v654
    %672 = vmatprep.subr.mxu0 %v659
    %673 = vmatpush1.msra.mxu0 %v658
    %674 = vmatprep.subr.mxu0 0.0
    %675 = vmatpush1.msra.mxu0 0.0
    %676 = vmatprep.subr.mxu0 0.0
    %677 = vmatpush1.msra.mxu0 0.0
    %678 = vmatprep.subr.mxu0 0.0
    %679 = vmatpush1.msra.mxu0 0.0
    %680 = vmatprep.subr.mxu0 0.0
    %681 = vmatpush1.msra.mxu0 0.0
    %682 = vmatprep.subr.mxu0 0.0
    %683 = vmatpush1.msra.mxu0 0.0
    %684 = vmatprep.subr.mxu0 0.0
    %685 = vmatpush1.msra.mxu0 0.0
    %686 = vmatprep.subr.mxu0 0.0
    %687 = vmatpush1.msra.mxu0 0.0
    %688 = vmatprep.subr.mxu0 0.0
    %689 = vmatpush1.msra.mxu0 0.0
    %690 = vmatprep.subr.mxu0 0.0
    %691 = vmatpush1.msra.mxu0 0.0
    %692 = vmatprep.subr.mxu0 0.0
    %693 = vmatpush1.msra.mxu0 0.0
    %694 = vmatprep.subr.mxu0 0.0
    %695 = vmatpush1.msra.mxu0 0.0
    %696 = vmatprep.subr.mxu0 0.0
    %697 = vmatpush1.msra.mxu0 0.0
    %698 = vmatprep.subr.mxu0 0.0
    %699 = vmatpush1.msra.mxu0 0.0
    %700 = vmatprep.subr.mxu0 0.0
    %701 = vmatpush1.msra.mxu0 0.0
    %702 = vmatprep.subr.mxu0 0.0
    %703 = vmatpush1.msra.mxu0 0.0
    %704 = vmatprep.subr.mxu0 0.0
    %705 = vmatpush1.msra.mxu0 0.0
    %706 = vmatprep.subr.mxu0 0.0
    %707 = vmatpush1.msra.mxu0 0.0
    %708 = vmatprep.subr.mxu0 0.0
    %709 = vmatpush1.msra.mxu0 0.0
    %710 = vmatprep.subr.mxu0 0.0
    %711 = vmatpush1.msra.mxu0 0.0
    %712 = vmatprep.subr.mxu0 0.0
    %713 = vmatpush1.msra.mxu0 0.0
    %714 = vmatprep.subr.mxu0 0.0
    %715 = vmatpush1.msra.mxu0 0.0
    %716 = vmatprep.subr.mxu0 0.0
    %717 = vmatpush1.msra.mxu0 0.0
    %718 = vmatprep.subr.mxu0 0.0
    %719 = vmatpush1.msra.mxu0 0.0
    %720 = vmatprep.subr.mxu0 0.0
    %721 = vmatpush1.msra.mxu0 0.0
    %722 = vmatprep.subr.mxu0 0.0
    %723 = vmatpush1.msra.mxu0 0.0
    %724 = vmatprep.subr.mxu0 0.0
    %725 = vmatpush1.msra.mxu0 0.0
    %726 = vmatprep.subr.mxu0 0.0
    %727 = vmatpush1.msra.mxu0 0.0
    %728 = vmatprep.subr.mxu0 0.0
    %729 = vmatpush1.msra.mxu0 0.0
    %730 = vmatprep.mubr.f32.mxu0 0.0
    %731 = vmatmul.mubr.f32.gmra.mrb[0].mxu0 %v664
    %v732 = vpop.f32.mrb[0].mxu0
    %v733 = vadd.f32 0.0, %v732
    %v734 = vpop.f32.mrb[0].mxu0
    %v735 = vadd.f32 0.0, %v734
    %736 = vdwg.mxu0
    %737 = vmatprep.subr.mxu0 %v649
    %738 = vmatpush1.msra.mxu0 %v648
    %739 = vmatprep.subr.mxu0 %v653
    %740 = vmatpush1.msra.mxu0 %v652
    %741 = vmatprep.subr.mxu0 %v657
    %742 = vmatpush1.msra.mxu0 %v656
    %743 = vmatprep.subr.mxu0 %v661
    %744 = vmatpush1.msra.mxu0 %v660
    %745 = vmatprep.subr.mxu0 0.0
    %746 = vmatpush1.msra.mxu0 0.0
    %747 = vmatprep.subr.mxu0 0.0
    %748 = vmatpush1.msra.mxu0 0.0
    %749 = vmatprep.subr.mxu0 0.0
    %750 = vmatpush1.msra.mxu0 0.0
    %751 = vmatprep.subr.mxu0 0.0
    %752 = vmatpush1.msra.mxu0 0.0
    %753 = vmatprep.subr.mxu0 0.0
    %754 = vmatpush1.msra.mxu0 0.0
    %755 = vmatprep.subr.mxu0 0.0
    %756 = vmatpush1.msra.mxu0 0.0
    %757 = vmatprep.subr.mxu0 0.0
    %758 = vmatpush1.msra.mxu0 0.0
    %759 = vmatprep.subr.mxu0 0.0
    %760 = vmatpush1.msra.mxu0 0.0
    %761 = vmatprep.subr.mxu0 0.0
    %762 = vmatpush1.msra.mxu0 0.0
    %763 = vmatprep.subr.mxu0 0.0
    %764 = vmatpush1.msra.mxu0 0.0
    %765 = vmatprep.subr.mxu0 0.0
    %766 = vmatpush1.msra.mxu0 0.0
    %767 = vmatprep.subr.mxu0 0.0
    %768 = vmatpush1.msra.mxu0 0.0
    %769 = vmatprep.subr.mxu0 0.0
    %770 = vmatpush1.msra.mxu0 0.0
    %771 = vmatprep.subr.mxu0 0.0
    %772 = vmatpush1.msra.mxu0 0.0
    %773 = vmatprep.subr.mxu0 0.0
    %774 = vmatpush1.msra.mxu0 0.0
    %775 = vmatprep.subr.mxu0 0.0
    %776 = vmatpush1.msra.mxu0 0.0
    %777 = vmatprep.subr.mxu0 0.0
    %778 = vmatpush1.msra.mxu0 0.0
    %779 = vmatprep.subr.mxu0 0.0
    %780 = vmatpush1.msra.mxu0 0.0
    %781 = vmatprep.subr.mxu0 0.0
    %782 = vmatpush1.msra.mxu0 0.0
    %783 = vmatprep.subr.mxu0 0.0
    %784 = vmatpush1.msra.mxu0 0.0
    %785 = vmatprep.subr.mxu0 0.0
    %786 = vmatpush1.msra.mxu0 0.0
    %787 = vmatprep.subr.mxu0 0.0
    %788 = vmatpush1.msra.mxu0 0.0
    %789 = vmatprep.subr.mxu0 0.0
    %790 = vmatpush1.msra.mxu0 0.0
    %791 = vmatprep.subr.mxu0 0.0
    %792 = vmatpush1.msra.mxu0 0.0
    %793 = vmatprep.subr.mxu0 0.0
    %794 = vmatpush1.msra.mxu0 0.0
    %795 = vmatprep.subr.mxu0 0.0
    %796 = vmatpush1.msra.mxu0 0.0
    %797 = vmatprep.subr.mxu0 0.0
    %798 = vmatpush1.msra.mxu0 0.0
    %799 = vmatprep.subr.mxu0 0.0
    %800 = vmatpush1.msra.mxu0 0.0
    %801 = vmatprep.mubr.f32.mxu0 0.0
    %802 = vmatmul.mubr.f32.gmra.mrb[0].mxu0 %v664
    %v803 = vpop.f32.mrb[0].mxu0
    %v804 = vadd.f32 0.0, %v803
    %v805 = vpop.f32.mrb[0].mxu0
    %v806 = vadd.f32 0.0, %v805
    %807 = vdwg.mxu0
    %v808 = vadd.s32 %v87, 256
    %v809 = vadd.s32 %v87, 384
    %vm810 = vcmp.ge.s32.totalorder %v87, 0
    %vm811 = vcmp.ge.s32.totalorder %v88, 0
    %vm812 = vcmp.ge.s32.totalorder %v808, 0
    %vm813 = vcmp.ge.s32.totalorder %v809, 0
    %vm814 = vcmp.lt.s32.totalorder %v87, 128
    %vm815 = vcmp.lt.s32.totalorder %v88, 128
    %vm816 = vcmp.lt.s32.totalorder %v808, 128
    %vm817 = vcmp.lt.s32.totalorder %v809, 128
    %vm818 = vmand %vm810, %vm814
    %vm819 = vmand %vm811, %vm815
    %vm820 = vmand %vm812, %vm816
    %vm821 = vmand %vm813, %vm817
    %v822 = vsel %vm818, %v733, 0.0
    %v823 = vsel %vm819, %v735, 0.0
    %v824 = vsel %vm820, %v804, 0.0
    %v825 = vsel %vm821, %v806, 0.0
    %vm826 = vcmask 1040384
    %v827 = vsel %vm826, %v822, 0.0
    %v828 = vsel %vm826, %v823, 0.0
    %v829 = vadd.f32 %v827, %v828
    %v830 = vsel %vm826, %v824, 0.0
    %v831 = vadd.f32 %v829, %v830
    %v832 = vsel %vm826, %v825, 0.0
    %v833 = vadd.f32 %v831, %v832
    %834 = vadd.xlane.f32.xlu0 %v833
    %v835 = vpop.xlane.xlu0 %834
    %v836 = vrot.slane %v835, 4
    %v837 = vadd.f32 %v835, %v836
    %v838 = vrot.slane %v837, 2
    %v839 = vadd.f32 %v837, %v838
    %v840 = vrot.slane %v839, 1
    %v841 = vadd.f32 %v839, %v840
    %s842 = vtos %v841
    %s843 = smul.f32 %s842, 0.0078125
    %vm844 = vcmp.ge.s32.totalorder %v808, 128
    %vm845 = vcmp.ge.s32.totalorder %v809, 128
    %vm846 = vcmp.lt.s32.totalorder %v87, 256
    %vm847 = vcmp.lt.s32.totalorder %v88, 256
    %vm848 = vcmp.lt.s32.totalorder %v808, 256
    %vm849 = vcmp.lt.s32.totalorder %v809, 256
    %vm850 = vmand %vm89, %vm846
    %vm851 = vmand %vm90, %vm847
    %vm852 = vmand %vm844, %vm848
    %vm853 = vmand %vm845, %vm849
    %v854 = vsel %vm850, %v733, 0.0
    %v855 = vsel %vm851, %v735, 0.0
    %v856 = vsel %vm852, %v804, 0.0
    %v857 = vsel %vm853, %v806, 0.0
    %v858 = vsel %vm826, %v854, 0.0
    %v859 = vsel %vm826, %v855, 0.0
    %v860 = vadd.f32 %v858, %v859
    %v861 = vsel %vm826, %v856, 0.0
    %v862 = vadd.f32 %v860, %v861
    %v863 = vsel %vm826, %v857, 0.0
    %v864 = vadd.f32 %v862, %v863
    %865 = vadd.xlane.f32.xlu0 %v864
    %v866 = vpop.xlane.xlu0 %865
    %v867 = vrot.slane %v866, 4
    %v868 = vadd.f32 %v866, %v867
    %v869 = vrot.slane %v868, 2
    %v870 = vadd.f32 %v868, %v869
    %v871 = vrot.slane %v870, 1
    %v872 = vadd.f32 %v870, %v871
    %s873 = vtos %v872
    %s874 = smul.f32 %s873, 0.0078125
    %vm875 = vcmp.ge.s32.totalorder %v87, 256
    %vm876 = vcmp.ge.s32.totalorder %v88, 256
    %vm877 = vcmp.ge.s32.totalorder %v808, 256
    %vm878 = vcmp.ge.s32.totalorder %v809, 256
    %vm879 = vcmp.lt.s32.totalorder %v87, 384
    %vm880 = vcmp.lt.s32.totalorder %v88, 384
    %vm881 = vcmp.lt.s32.totalorder %v808, 384
    %vm882 = vcmp.lt.s32.totalorder %v809, 384
    %vm883 = vmand %vm875, %vm879
    %vm884 = vmand %vm876, %vm880
    %vm885 = vmand %vm877, %vm881
    %vm886 = vmand %vm878, %vm882
    %v887 = vsel %vm883, %v733, 0.0
    %v888 = vsel %vm884, %v735, 0.0
    %v889 = vsel %vm885, %v804, 0.0
    %v890 = vsel %vm886, %v806, 0.0
    %v891 = vsel %vm826, %v887, 0.0
    %v892 = vsel %vm826, %v888, 0.0
    %v893 = vadd.f32 %v891, %v892
    %v894 = vsel %vm826, %v889, 0.0
    %v895 = vadd.f32 %v893, %v894
    %v896 = vsel %vm826, %v890, 0.0
    %v897 = vadd.f32 %v895, %v896
    %898 = vadd.xlane.f32.xlu0 %v897
    %v899 = vpop.xlane.xlu0 %898
    %v900 = vrot.slane %v899, 4
    %v901 = vadd.f32 %v899, %v900
    %v902 = vrot.slane %v901, 2
    %v903 = vadd.f32 %v901, %v902
    %v904 = vrot.slane %v903, 1
    %v905 = vadd.f32 %v903, %v904
    %s906 = vtos %v905
    %s907 = smul.f32 %s906, 0.0078125
    %vm908 = vcmp.ge.s32.totalorder %v87, 384
    %vm909 = vcmp.ge.s32.totalorder %v88, 384
    %vm910 = vcmp.ge.s32.totalorder %v808, 384
    %vm911 = vcmp.ge.s32.totalorder %v809, 384
    %vm912 = vcmp.lt.s32.totalorder %v87, 512
    %vm913 = vcmp.lt.s32.totalorder %v88, 512
    %vm914 = vcmp.lt.s32.totalorder %v808, 512
    %vm915 = vcmp.lt.s32.totalorder %v809, 512
    %vm916 = vmand %vm908, %vm912
    %vm917 = vmand %vm909, %vm913
    %vm918 = vmand %vm910, %vm914
    %vm919 = vmand %vm911, %vm915
    %v920 = vsel %vm916, %v733, 0.0
    %v921 = vsel %vm917, %v735, 0.0
    %v922 = vsel %vm918, %v804, 0.0
    %v923 = vsel %vm919, %v806, 0.0
    %v924 = vsel %vm826, %v920, 0.0
    %v925 = vsel %vm826, %v921, 0.0
    %v926 = vadd.f32 %v924, %v925
    %v927 = vsel %vm826, %v922, 0.0
    %v928 = vadd.f32 %v926, %v927
    %v929 = vsel %vm826, %v923, 0.0
    %v930 = vadd.f32 %v928, %v929
    %931 = vadd.xlane.f32.xlu0 %v930
    %v932 = vpop.xlane.xlu0 %931
    %v933 = vrot.slane %v932, 4
    %v934 = vadd.f32 %v932, %v933
    %v935 = vrot.slane %v934, 2
    %v936 = vadd.f32 %v934, %v935
    %v937 = vrot.slane %v936, 1
    %v938 = vadd.f32 %v936, %v937
    %s939 = vtos %v938
    %s940 = smul.f32 %s939, 0.0078125
    %v941 = vsub.f32 %v431, %v210
    %v942 = vsub.f32 %v432, %v211
    %v943 = vsub.f32 %v433, %v212
    %v944 = vsub.f32 %v434, %v213
    %v945 = vand.u32 2147483647, %v941
    %v946 = vand.u32 2147483647, %v942
    %v947 = vand.u32 2147483647, %v943
    %v948 = vand.u32 2147483647, %v944
    %v949 = vsel %vm814, %v945, 0.0
    %v950 = vsel %vm815, %v946, 0.0
    %v951 = vsel %vm814, %v947, 0.0
    %v952 = vsel %vm815, %v948, 0.0
    %v953 = vadd.f32 %v949, %v950
    %v954 = vadd.f32 %v953, %v951
    %v955 = vadd.f32 %v954, %v952
    %956 = vadd.xlane.f32.xlu0 %v955
    %v957 = vpop.xlane.xlu0 %956
    %v958 = vrot.slane %v957, 4
    %v959 = vadd.f32 %v957, %v958
    %v960 = vrot.slane %v959, 2
    %v961 = vadd.f32 %v959, %v960
    %v962 = vrot.slane %v961, 1
    %v963 = vadd.f32 %v961, %v962
    %s964 = vtos %v963
    %s965 = smul.f32 %s964, 0.00048828125
    %v966 = vsel %vm89, %v945, 0.0
    %v967 = vsel %vm90, %v946, 0.0
    %v968 = vsel %vm89, %v947, 0.0
    %v969 = vsel %vm90, %v948, 0.0
    %v970 = vadd.f32 %v966, %v967
    %v971 = vadd.f32 %v970, %v968
    %v972 = vadd.f32 %v971, %v969
    %973 = vadd.xlane.f32.xlu0 %v972
    %v974 = vpop.xlane.xlu0 %973
    %v975 = vrot.slane %v974, 4
    %v976 = vadd.f32 %v974, %v975
    %v977 = vrot.slane %v976, 2
    %v978 = vadd.f32 %v976, %v977
    %v979 = vrot.slane %v978, 1
    %v980 = vadd.f32 %v978, %v979
    %s981 = vtos %v980
    %s982 = smul.f32 %s981, 0.00048828125
    %s983 = ssub.f32 %s843, 1.0
    %s984 = smul.f32 %s983, %s983
    %s985 = ssub.f32 %s874, 1.0
    %s986 = smul.f32 %s985, %s985
    %s987 = smul.f32 %s843, %s843
    %s988 = ssub.f32 %s907, 1.0
    %s989 = smul.f32 %s988, %s988
    %s990 = sadd.f32 %s987, %s989
    %s991 = smul.f32 %s990, 0.5
    %s992 = smul.f32 %s874, %s874
    %s993 = ssub.f32 %s940, 1.0
    %s994 = smul.f32 %s993, %s993
    %s995 = sadd.f32 %s992, %s994
    %s996 = smul.f32 %s995, 0.5
    %vm997 = vcmp.eq.s32.totalorder %v87, 0
    %vm998 = vcmp.eq.s32.totalorder %v88, 0
    %v999 = vstv %s843
    %v1000 = vsel %vm997, %v999, 0.0
    %v1001 = vsel %vm998, %v999, 0.0
    %vm1002 = vcmp.eq.s32.totalorder %v87, 1
    %vm1003 = vcmp.eq.s32.totalorder %v88, 1
    %v1004 = vstv %s874
    %v1005 = vsel %vm1002, %v1004, %v1000
    %v1006 = vsel %vm1003, %v1004, %v1001
    %vm1007 = vcmp.eq.s32.totalorder %v87, 2
    %vm1008 = vcmp.eq.s32.totalorder %v88, 2
    %v1009 = vstv %s907
    %v1010 = vsel %vm1007, %v1009, %v1005
    %v1011 = vsel %vm1008, %v1009, %v1006
    %vm1012 = vcmp.eq.s32.totalorder %v87, 3
    %vm1013 = vcmp.eq.s32.totalorder %v88, 3
    %v1014 = vstv %s940
    %v1015 = vsel %vm1012, %v1014, %v1010
    %v1016 = vsel %vm1013, %v1014, %v1011
    %vm1017 = vcmp.eq.s32.totalorder %v87, 4
    %vm1018 = vcmp.eq.s32.totalorder %v88, 4
    %v1019 = vstv %s965
    %v1020 = vsel %vm1017, %v1019, %v1015
    %v1021 = vsel %vm1018, %v1019, %v1016
    %vm1022 = vcmp.eq.s32.totalorder %v87, 5
    %vm1023 = vcmp.eq.s32.totalorder %v88, 5
    %v1024 = vstv %s982
    %v1025 = vsel %vm1022, %v1024, %v1020
    %v1026 = vsel %vm1023, %v1024, %v1021
    %vm1027 = vcmp.eq.s32.totalorder %v87, 6
    %vm1028 = vcmp.eq.s32.totalorder %v88, 6
    %v1029 = vstv %s984
    %v1030 = vsel %vm1027, %v1029, %v1025
    %v1031 = vsel %vm1028, %v1029, %v1026
    %vm1032 = vcmp.eq.s32.totalorder %v87, 7
    %vm1033 = vcmp.eq.s32.totalorder %v88, 7
    %v1034 = vstv %s986
    %v1035 = vsel %vm1032, %v1034, %v1030
    %v1036 = vsel %vm1033, %v1034, %v1031
    %vm1037 = vcmp.eq.s32.totalorder %v87, 8
    %vm1038 = vcmp.eq.s32.totalorder %v88, 8
    %v1039 = vstv %s991
    %v1040 = vsel %vm1037, %v1039, %v1035
    %v1041 = vsel %vm1038, %v1039, %v1036
    %vm1042 = vcmp.eq.s32.totalorder %v87, 9
    %vm1043 = vcmp.eq.s32.totalorder %v88, 9
    %v1044 = vstv %s996
    %v1045 = vsel %vm1042, %v1044, %v1040
    %v1046 = vsel %vm1043, %v1044, %v1041
    %v1047 = vlaneseq
    %v1048 = vshrl.u32 %v1047, 7
    %vm1049 = vcmp.eq.s32.totalorder %v1048, 0
    %vm1050 = vcmp.eq.s32.totalorder %v1048, 1
    %vm1051 = vcmp.eq.s32.totalorder %v1048, 2
    %v1052 = vsel %vm1051, %v1045, 0.0
    %v1053 = vsel %vm1051, %v1046, 0.0
    %v1054 = vsel %vm1050, %v284, %v1052
    %v1055 = vsel %vm1050, %v288, %v1053
    %v1056 = vsel %vm1049, %v249, %v1054
    %v1057 = vsel %vm1049, %v253, %v1055
    %1058 = vst [vmem:[#allocation13] sm:$0xff] %v1056
    %1059 = vst [vmem:[#allocation13 + $0x8] sm:$0xff] %v1057
    // Predicated region
    $region42: #{tpu_custom_call.1} parent=1 // pred_check
      _
    $region43: #{tpu_custom_call.1} parent=1 // pred_check_branch
      %1061 = sbr.rel (0) target = $region45
    $region44: #{tpu_custom_call.1} parent=1 // pred_region
      %s1063 = ssub.s32 512, 512
      %1064 = vsyncadd [#allocation4], %s1063
      %s1065 = sshll.u32 [#allocation12], 4
      %s1066 = int_to_ptr.vmem [resolvable:$true] %s1065
      %1071 = dma.vmem_to_hbm [thread:$0]  %s1066, 512, %s5, [#allocation4], 256, 256, 16
    $region45: #{tpu_custom_call.1} parent=1 // pred_fallthru
      _
    // Predicated region
    $region46: #{tpu_custom_call.1} parent=1 // pred_check
      _
    $region47: #{tpu_custom_call.1} parent=1 // pred_check_branch
      %1073 = sbr.rel (0) target = $region49
    $region48: #{tpu_custom_call.1} parent=1 // pred_region
      %s1075 = ssub.s32 256, 256
      %1076 = vsyncadd [#allocation14], %s1075
      %s1078 = sshll.u32 [#allocation13], 4
      %s1079 = int_to_ptr.vmem [resolvable:$true] %s1078
      %1081 = dma.vmem_to_hbm [thread:$0]  %s1079, 256, %s6, [#allocation14]
    $region49: #{tpu_custom_call.1} parent=1 // pred_fallthru
      _
    // Predicated region
    $region50: #{tpu_custom_call.1} parent=1 // pred_check
      _
    $region51: #{tpu_custom_call.1} parent=1 // pred_check_branch
      %1083 = sbr.rel (0) target = $region53
    $region52: #{tpu_custom_call.1} parent=1 // pred_region
      %1084 = dma.done [#allocation4], 512
    $region53: #{tpu_custom_call.1} parent=1 // pred_fallthru
      _
    // Predicated region
    $region54: #{tpu_custom_call.1} parent=1 // pred_check
      _
    $region55: #{tpu_custom_call.1} parent=1 // pred_check_branch
      %1086 = sbr.rel (0) target = $region57
    $region56: #{tpu_custom_call.1} parent=1 // pred_region
      %1087 = dma.done [#allocation14], 256
    $region57: #{tpu_custom_call.1} parent=1 // pred_fallthru
      _
    %1088 = vsyncpa [#allocation3], 1
    %1089 = vsyncpa [#allocation8], 1
    %1090 = vsyncpa [#allocation11], 1
    %1091 = vsyncpa [#allocation4], 1
    %1092 = vsyncpa [#allocation14], 1
    %1093 = vsyncpa [#allocation5], 1

</llo_original>
